<compile_context>
chip_gen: v6e
topology: v6e:2x2x1
jax: 0.10.0
libtpu: 0.0.40
codegen_flags: <defaults>
</compile_context>

<pallas_src>
import functools

import jax
import jax.numpy as jnp
from jax import lax
from jax.experimental import pallas as pl
from jax.experimental.pallas import tpu as pltpu

# -------------------- deterministic "config" --------------------
TEMPERATURE_LAMBDA = 10.0
MARGIN = 0.2
MAX_VIOLATION = True          # cfg.max_violation
CLAMP_MIN = -1e10             # torch clamp; a no-op for finite features

# TODO(synk): cfg.max_violation=False returns the raw (B, B) cost matrix per
# turn (different output shape); only the max-violation reduction is fused here.
assert MAX_VIOLATION, "only cfg.max_violation=True is implemented"


# ===================== fused similarity + contrastive kernel =====================
def _grounding_kernel(txt_ref, img_ref, out_ref, *, bsize, nregions,
                      turns_per_step):
    """One grid step: `turns_per_step` turns -> per-turn max-violation losses.

    txt_ref: (turns_per_step * B, D) bf16  queries, row q = t_local * B + caption j
    img_ref: (R, D, B)               bf16  region-major image feats, mask pre-folded,
                                           images on lanes (resident across the grid)
    out_ref: (turns_per_step, B)     f32   per-turn contrastive losses
    """
    nq = turns_per_step * bsize
    txt = txt_ref[...]                                   # (Q, D) bf16

    # ---- sims = sum_r attn * softmax_r(lambda * attn), online over regions ----
    # Images live on lanes, so the per-(query, image) softmax needs no segment
    # bookkeeping; the (Q, B*R) logits tensor is never materialized.
    m = jnp.full((nq, bsize), -jnp.inf, dtype=jnp.float32)
    l = jnp.zeros((nq, bsize), dtype=jnp.float32)
    acc = jnp.zeros((nq, bsize), dtype=jnp.float32)
    # Static unroll: R is small (tens of regions), each iteration carries only
    # three (Q, B) f32 tiles.  TODO(synk): switch to lax.fori_loop / pl.loop
    # with VMEM scratch carries for very large region counts.
    for r in range(nregions):
        a = jnp.dot(txt, img_ref[r], preferred_element_type=jnp.float32)  # (Q, B)
        # torch's .clamp(min=-1e10) dropped: finite f32 logits never reach it.
        scaled = TEMPERATURE_LAMBDA * a
        m_new = jnp.maximum(m, scaled)
        alpha = jnp.exp(m - m_new)
        p = jnp.exp(scaled - m_new)
        l = alpha * l + p
        acc = alpha * acc + a * p
        m = m_new
    s = acc / l          # (Q, B); s[t*B + j, i] = sims[image i, caption j, turn t]

    # ---- per-turn max-violation contrastive loss ----
    row = lax.broadcasted_iota(jnp.int32, (bsize, bsize), 0)
    col = lax.broadcasted_iota(jnp.int32, (bsize, bsize), 1)
    eye = row == col

    for t in range(turns_per_step):                      # small static loop
        # Tiny (B, B) f32 slab for this turn (clean view whenever B % 8 == 0):
        # rows = captions j, cols = images i  (== torch `scores` transposed).
        s_t = s[t * bsize:(t + 1) * bsize, :]
        diag = jnp.where(eye, s_t, 0.0)
        d_img = jnp.sum(diag, axis=0, keepdims=True)     # (1, B): s_t[i, i]
        d_cap = jnp.sum(diag, axis=1, keepdims=True)     # (B, 1): s_t[j, j]
        cost_cap = jnp.where(eye, 0.0, jnp.maximum(MARGIN + s_t - d_img, 0.0))
        cost_img = jnp.where(eye, 0.0, jnp.maximum(MARGIN + s_t - d_cap, 0.0))
        # loss[k] = max_j relu(m + S[j,k] - S[k,k]) + max_i relu(m + S[k,i] - S[k,k])
        out_ref[t] = jnp.max(cost_cap, axis=0) + jnp.max(cost_img, axis=1)   # (B,)


# ===================== generation-aware planning helpers =====================
def _tensorcores_per_chip():
    """Best-effort TensorCore count visible to one Pallas grid (megacore)."""
    try:
        kind = jax.devices()[0].device_kind.lower()
    except Exception:                      # pragma: no cover - defensive
        return 1
    # v4 / v5p / v7x expose 2 TensorCores per chip to a single kernel.
    return 2 if ("v4" in kind or "v5p" in kind or "7" in kind) else 1


def _vmem_budget_bytes():
    """~75% of per-core VMEM: ~96 MiB on v5e/v6e (128 MiB), ~48 MiB on v7x (64 MiB)."""
    try:
        cap = int(pltpu.get_tpu_info().vmem_capacity_bytes)
    except Exception:                      # pragma: no cover - defensive
        cap = 64 * 1024 * 1024
    return min((cap * 3) // 4, 96 * 1024 * 1024)


def _pick_turns_per_step(nturns, bsize, nregions, fdim, ncores, vmem_budget):
    """Largest divisor `tb` of T whose working set fits the VMEM budget.

    Single-TC parts (v5e/v6e): prefer tb = T (one fat M = T*B matmul, one grid
    step).  Megacore parts (v7x): keep >= ncores grid steps so the 'parallel'
    turn-block axis can be sharded across TensorCores.
    """
    def fits(tb):
        q = tb * bsize
        txt = 2 * q * fdim * 2                        # double-buffered bf16 queries
        img = 2 * nregions * fdim * bsize * 2         # resident bf16 image block (dbl-buf)
        carry = 3 * q * bsize * 4                     # online-softmax carries (f32)
        tmp = 6 * q * bsize * 4                       # sims / cost temporaries (f32)
        out = 2 * tb * bsize * 4
        return txt + img + carry + tmp + out <= vmem_budget

    best = 1
    for tb in range(1, nturns + 1):
        if nturns % tb:
            continue
        if ncores > 1 and (nturns // tb) < ncores:
            continue
        if fits(tb):
            best = tb
    return best


# ===================== wrapper =====================
def grounding_forward_loss(img_feats, img_masks, txt_feats):
    """GroundingLoss.forward_loss with instance_dim=1, reduce_mode=1. Returns (B, T)."""
    B, R, D = img_feats.shape
    _, T, _ = txt_feats.shape

    ncores = _tensorcores_per_chip()
    vmem_budget = _vmem_budget_bytes()
    tb = _pick_turns_per_step(T, B, R, D, ncores, vmem_budget)
    nsteps = T // tb

    # Fold the 0/1 region mask into the image features: column-scaling the RHS
    # before the matmul equals `attn * mask` after it (bit-exact for binary
    # masks).  Region-major layout with images on lanes lets the kernel index
    # one clean (D, B) slab per region (leading-axis index, never tile-crossing).
    img_p = jnp.transpose(img_feats * img_masks[:, :, None], (1, 2, 0))   # (R, D, B)
    img_p = img_p.astype(jnp.bfloat16)

    # Queries turn-major then caption, pre-blocked per grid step so the text
    # BlockSpec's last two dims always equal the full array dims (no (8,128)
    # block-shape issues for any B, D).
    txt_p = jnp.transpose(txt_feats, (1, 0, 2)).reshape(nsteps, tb * B, D)
    txt_p = txt_p.astype(jnp.bfloat16)

    kernel = functools.partial(_grounding_kernel, bsize=B, nregions=R,
                               turns_per_step=tb)

    # TODO(synk): the resident (R, D, B) image block is revisited every step;
    # once pl.Buffered(1) is verified on all target toolchains, single-buffer it
    # via pipeline_mode to halve its footprint under v7x's 64 MiB VMEM.
    # TODO(synk): for very large B*R*D add an image-block grid axis with an
    # online-softmax carry instead of keeping the whole image block resident.
    losses = pl.pallas_call(
        kernel,
        out_shape=jax.ShapeDtypeStruct((nsteps, tb, B), jnp.float32),
        grid_spec=pltpu.PrefetchScalarGridSpec(
            num_scalar_prefetch=0,
            grid=(nsteps,),
            in_specs=[
                pl.BlockSpec((None, tb * B, D), lambda g: (g, 0, 0)),   # per-step queries
                pl.BlockSpec((R, D, B), lambda g: (0, 0, 0)),           # resident img feats
            ],
            out_specs=pl.BlockSpec((None, tb, B), lambda g: (g, 0, 0)),
        ),
        compiler_params=pltpu.CompilerParams(
            dimension_semantics=("parallel",),   # shard turn-blocks over v7x's 2 TCs
            vmem_limit_bytes=int(vmem_budget),
        ),
    )(txt_p, img_p)

    # (nsteps, tb, B) -> (T, B) -> (B, T) == torch.stack(per_turn_losses, -1)
    return jnp.transpose(losses.reshape(T, B), (1, 0))


# ===================== pure-JAX reference for validation =====================
def _reference(img_feats, img_masks, txt_feats):
    # Mirrors the torch module op-for-op; matmul inputs cast to bf16 (like the
    # kernel), everything else in f32.
    B, R, D = img_feats.shape
    T = txt_feats.shape[1]
    img_bf = img_feats.astype(jnp.bfloat16)
    txt_bf = txt_feats.astype(jnp.bfloat16)
    q = jnp.broadcast_to(txt_bf.reshape(1, B * T, D), (B, B * T, D))
    attn = jnp.einsum("bqd,brd->bqr", q, img_bf,
                      preferred_element_type=jnp.float32)
    attn = attn * img_masks[:, None, :]
    scaled = TEMPERATURE_LAMBDA * jnp.maximum(attn, CLAMP_MIN)
    scaled = scaled - jnp.max(scaled, axis=-1, keepdims=True)
    scores = jax.nn.softmax(scaled, axis=-1)
    sims = jnp.sum(attn * scores, axis=-1).reshape(B, B, T)   # sims[i, j, t]

    eye = jnp.eye(B) > 0.5
    losses = []
    for t in range(T):
        s = sims[:, :, t]
        diag = jnp.diag(s)
        cs = jnp.maximum(MARGIN + s - diag[:, None], 0.0)
        ci = jnp.maximum(MARGIN + s - diag[None, :], 0.0)
        cs = jnp.where(eye, 0.0, cs)
        ci = jnp.where(eye, 0.0, ci)
        losses.append(jnp.max(cs, axis=1) + jnp.max(ci, axis=0))
    return jnp.stack(losses, -1)


# ===================== main =====================
if __name__ == "__main__":
    B, R, T, D = 2, 16, 8, 32
    key = jax.random.PRNGKey(0)
    k1, k2, k3 = jax.random.split(key, 3)

    img_feats = jax.random.normal(k1, (B, R, D), dtype=jnp.float32)
    txt_feats = jax.random.normal(k2, (B, T, D), dtype=jnp.float32)
    # binary region masks (at least one region valid per image)
    img_masks = (jax.random.uniform(k3, (B, R)) > 0.3).astype(jnp.float32)
    img_masks = img_masks.at[:, 0].set(1.0)

    losses = jax.jit(grounding_forward_loss)(img_feats, img_masks, txt_feats)
    losses = jax.block_until_ready(losses)

    ref = _reference(img_feats, img_masks, txt_feats)
    assert losses.shape == (B, T), losses.shape
    assert jnp.allclose(losses, ref, atol=1e-2, rtol=1e-2), (losses, ref)

    print("KERNEL_OK")
</pallas_src>

<mosaic_0001>
module attributes {stable_mosaic.version = 11 : i64} {
  func.func @_grounding_kernel(%arg0: i32, %arg1: memref<1x16x32xbf16, #tpu.memory_space<vmem>>, %arg2: memref<16x32x2xbf16, #tpu.memory_space<vmem>>, %arg3: memref<1x8x2xf32, #tpu.memory_space<vmem>>) attributes {dimension_semantics = [#tpu.dimension_semantics<parallel>], iteration_bounds = array<i64: 1>, scalar_prefetch = 0 : i64, scratch_operands = 0 : i64, tpu.core_type = #tpu.core_type<tc>, window_params = [{transform_indices = @transform_0, window_bounds = array<i64: 1, 16, 32>}, {pipeline_mode = #tpu.pipeline_mode<synchronous>, transform_indices = @transform_1, window_bounds = array<i64: 16, 32, 2>}, {transform_indices = @transform_2, window_bounds = array<i64: 1, 8, 2>}]} {
    %c0 = arith.constant 0 : index
    %c0_0 = arith.constant 0 : index
    %c0_1 = arith.constant 0 : index
    %0 = vector.load %arg1[%c0, %c0_0, %c0_1] : memref<1x16x32xbf16, #tpu.memory_space<vmem>>, vector<1x16x32xbf16>
    %1 = vector.shape_cast %0 : vector<1x16x32xbf16> to vector<16x32xbf16>
    %cst = arith.constant 0xFF800000 : f32
    %2 = vector.broadcast %cst : f32 to vector<16x2xf32>
    %cst_2 = arith.constant 0.000000e+00 : f32
    %3 = vector.broadcast %cst_2 : f32 to vector<16x2xf32>
    %cst_3 = arith.constant 0.000000e+00 : f32
    %4 = vector.broadcast %cst_3 : f32 to vector<16x2xf32>
    %c0_4 = arith.constant 0 : index
    %c0_5 = arith.constant 0 : index
    %c0_6 = arith.constant 0 : index
    %5 = vector.load %arg2[%c0_4, %c0_5, %c0_6] : memref<16x32x2xbf16, #tpu.memory_space<vmem>>, vector<1x32x2xbf16>
    %6 = vector.shape_cast %5 : vector<1x32x2xbf16> to vector<32x2xbf16>
    %cst_7 = arith.constant dense<0.000000e+00> : vector<16x2xf32>
    %7 = tpu.matmul %1, %6, %cst_7 {dimension_numbers = #tpu.dot_dimension_numbers<[1], [0], [0], [1], [0, 0, 1, 1], [], []>} : vector<16x32xbf16>, vector<32x2xbf16>, vector<16x2xf32> -> vector<16x2xf32>
    %cst_8 = arith.constant 1.000000e+01 : f32
    %8 = vector.broadcast %cst_8 : f32 to vector<16x2xf32>
    %9 = arith.mulf %8, %7 : vector<16x2xf32>
    %10 = arith.maximumf %2, %9 : vector<16x2xf32>
    %11 = arith.subf %2, %10 : vector<16x2xf32>
    %12 = math.exp %11 : vector<16x2xf32>
    %13 = arith.subf %9, %10 : vector<16x2xf32>
    %14 = math.exp %13 : vector<16x2xf32>
    %15 = arith.mulf %12, %3 : vector<16x2xf32>
    %16 = arith.addf %15, %14 : vector<16x2xf32>
    %17 = arith.mulf %12, %4 : vector<16x2xf32>
    %18 = arith.mulf %7, %14 : vector<16x2xf32>
    %19 = arith.addf %17, %18 : vector<16x2xf32>
    %c1 = arith.constant 1 : index
    %c0_9 = arith.constant 0 : index
    %c0_10 = arith.constant 0 : index
    %20 = vector.load %arg2[%c1, %c0_9, %c0_10] : memref<16x32x2xbf16, #tpu.memory_space<vmem>>, vector<1x32x2xbf16>
    %21 = vector.shape_cast %20 : vector<1x32x2xbf16> to vector<32x2xbf16>
    %cst_11 = arith.constant dense<0.000000e+00> : vector<16x2xf32>
    %22 = tpu.matmul %1, %21, %cst_11 {dimension_numbers = #tpu.dot_dimension_numbers<[1], [0], [0], [1], [0, 0, 1, 1], [], []>} : vector<16x32xbf16>, vector<32x2xbf16>, vector<16x2xf32> -> vector<16x2xf32>
    %cst_12 = arith.constant 1.000000e+01 : f32
    %23 = vector.broadcast %cst_12 : f32 to vector<16x2xf32>
    %24 = arith.mulf %23, %22 : vector<16x2xf32>
    %25 = arith.maximumf %10, %24 : vector<16x2xf32>
    %26 = arith.subf %10, %25 : vector<16x2xf32>
    %27 = math.exp %26 : vector<16x2xf32>
    %28 = arith.subf %24, %25 : vector<16x2xf32>
    %29 = math.exp %28 : vector<16x2xf32>
    %30 = arith.mulf %27, %16 : vector<16x2xf32>
    %31 = arith.addf %30, %29 : vector<16x2xf32>
    %32 = arith.mulf %27, %19 : vector<16x2xf32>
    %33 = arith.mulf %22, %29 : vector<16x2xf32>
    %34 = arith.addf %32, %33 : vector<16x2xf32>
    %c2 = arith.constant 2 : index
    %c0_13 = arith.constant 0 : index
    %c0_14 = arith.constant 0 : index
    %35 = vector.load %arg2[%c2, %c0_13, %c0_14] : memref<16x32x2xbf16, #tpu.memory_space<vmem>>, vector<1x32x2xbf16>
    %36 = vector.shape_cast %35 : vector<1x32x2xbf16> to vector<32x2xbf16>
    %cst_15 = arith.constant dense<0.000000e+00> : vector<16x2xf32>
    %37 = tpu.matmul %1, %36, %cst_15 {dimension_numbers = #tpu.dot_dimension_numbers<[1], [0], [0], [1], [0, 0, 1, 1], [], []>} : vector<16x32xbf16>, vector<32x2xbf16>, vector<16x2xf32> -> vector<16x2xf32>
    %cst_16 = arith.constant 1.000000e+01 : f32
    %38 = vector.broadcast %cst_16 : f32 to vector<16x2xf32>
    %39 = arith.mulf %38, %37 : vector<16x2xf32>
    %40 = arith.maximumf %25, %39 : vector<16x2xf32>
    %41 = arith.subf %25, %40 : vector<16x2xf32>
    %42 = math.exp %41 : vector<16x2xf32>
    %43 = arith.subf %39, %40 : vector<16x2xf32>
    %44 = math.exp %43 : vector<16x2xf32>
    %45 = arith.mulf %42, %31 : vector<16x2xf32>
    %46 = arith.addf %45, %44 : vector<16x2xf32>
    %47 = arith.mulf %42, %34 : vector<16x2xf32>
    %48 = arith.mulf %37, %44 : vector<16x2xf32>
    %49 = arith.addf %47, %48 : vector<16x2xf32>
    %c3 = arith.constant 3 : index
    %c0_17 = arith.constant 0 : index
    %c0_18 = arith.constant 0 : index
    %50 = vector.load %arg2[%c3, %c0_17, %c0_18] : memref<16x32x2xbf16, #tpu.memory_space<vmem>>, vector<1x32x2xbf16>
    %51 = vector.shape_cast %50 : vector<1x32x2xbf16> to vector<32x2xbf16>
    %cst_19 = arith.constant dense<0.000000e+00> : vector<16x2xf32>
    %52 = tpu.matmul %1, %51, %cst_19 {dimension_numbers = #tpu.dot_dimension_numbers<[1], [0], [0], [1], [0, 0, 1, 1], [], []>} : vector<16x32xbf16>, vector<32x2xbf16>, vector<16x2xf32> -> vector<16x2xf32>
    %cst_20 = arith.constant 1.000000e+01 : f32
    %53 = vector.broadcast %cst_20 : f32 to vector<16x2xf32>
    %54 = arith.mulf %53, %52 : vector<16x2xf32>
    %55 = arith.maximumf %40, %54 : vector<16x2xf32>
    %56 = arith.subf %40, %55 : vector<16x2xf32>
    %57 = math.exp %56 : vector<16x2xf32>
    %58 = arith.subf %54, %55 : vector<16x2xf32>
    %59 = math.exp %58 : vector<16x2xf32>
    %60 = arith.mulf %57, %46 : vector<16x2xf32>
    %61 = arith.addf %60, %59 : vector<16x2xf32>
    %62 = arith.mulf %57, %49 : vector<16x2xf32>
    %63 = arith.mulf %52, %59 : vector<16x2xf32>
    %64 = arith.addf %62, %63 : vector<16x2xf32>
    %c4 = arith.constant 4 : index
    %c0_21 = arith.constant 0 : index
    %c0_22 = arith.constant 0 : index
    %65 = vector.load %arg2[%c4, %c0_21, %c0_22] : memref<16x32x2xbf16, #tpu.memory_space<vmem>>, vector<1x32x2xbf16>
    %66 = vector.shape_cast %65 : vector<1x32x2xbf16> to vector<32x2xbf16>
    %cst_23 = arith.constant dense<0.000000e+00> : vector<16x2xf32>
    %67 = tpu.matmul %1, %66, %cst_23 {dimension_numbers = #tpu.dot_dimension_numbers<[1], [0], [0], [1], [0, 0, 1, 1], [], []>} : vector<16x32xbf16>, vector<32x2xbf16>, vector<16x2xf32> -> vector<16x2xf32>
    %cst_24 = arith.constant 1.000000e+01 : f32
    %68 = vector.broadcast %cst_24 : f32 to vector<16x2xf32>
    %69 = arith.mulf %68, %67 : vector<16x2xf32>
    %70 = arith.maximumf %55, %69 : vector<16x2xf32>
    %71 = arith.subf %55, %70 : vector<16x2xf32>
    %72 = math.exp %71 : vector<16x2xf32>
    %73 = arith.subf %69, %70 : vector<16x2xf32>
    %74 = math.exp %73 : vector<16x2xf32>
    %75 = arith.mulf %72, %61 : vector<16x2xf32>
    %76 = arith.addf %75, %74 : vector<16x2xf32>
    %77 = arith.mulf %72, %64 : vector<16x2xf32>
    %78 = arith.mulf %67, %74 : vector<16x2xf32>
    %79 = arith.addf %77, %78 : vector<16x2xf32>
    %c5 = arith.constant 5 : index
    %c0_25 = arith.constant 0 : index
    %c0_26 = arith.constant 0 : index
    %80 = vector.load %arg2[%c5, %c0_25, %c0_26] : memref<16x32x2xbf16, #tpu.memory_space<vmem>>, vector<1x32x2xbf16>
    %81 = vector.shape_cast %80 : vector<1x32x2xbf16> to vector<32x2xbf16>
    %cst_27 = arith.constant dense<0.000000e+00> : vector<16x2xf32>
    %82 = tpu.matmul %1, %81, %cst_27 {dimension_numbers = #tpu.dot_dimension_numbers<[1], [0], [0], [1], [0, 0, 1, 1], [], []>} : vector<16x32xbf16>, vector<32x2xbf16>, vector<16x2xf32> -> vector<16x2xf32>
    %cst_28 = arith.constant 1.000000e+01 : f32
    %83 = vector.broadcast %cst_28 : f32 to vector<16x2xf32>
    %84 = arith.mulf %83, %82 : vector<16x2xf32>
    %85 = arith.maximumf %70, %84 : vector<16x2xf32>
    %86 = arith.subf %70, %85 : vector<16x2xf32>
    %87 = math.exp %86 : vector<16x2xf32>
    %88 = arith.subf %84, %85 : vector<16x2xf32>
    %89 = math.exp %88 : vector<16x2xf32>
    %90 = arith.mulf %87, %76 : vector<16x2xf32>
    %91 = arith.addf %90, %89 : vector<16x2xf32>
    %92 = arith.mulf %87, %79 : vector<16x2xf32>
    %93 = arith.mulf %82, %89 : vector<16x2xf32>
    %94 = arith.addf %92, %93 : vector<16x2xf32>
    %c6 = arith.constant 6 : index
    %c0_29 = arith.constant 0 : index
    %c0_30 = arith.constant 0 : index
    %95 = vector.load %arg2[%c6, %c0_29, %c0_30] : memref<16x32x2xbf16, #tpu.memory_space<vmem>>, vector<1x32x2xbf16>
    %96 = vector.shape_cast %95 : vector<1x32x2xbf16> to vector<32x2xbf16>
    %cst_31 = arith.constant dense<0.000000e+00> : vector<16x2xf32>
    %97 = tpu.matmul %1, %96, %cst_31 {dimension_numbers = #tpu.dot_dimension_numbers<[1], [0], [0], [1], [0, 0, 1, 1], [], []>} : vector<16x32xbf16>, vector<32x2xbf16>, vector<16x2xf32> -> vector<16x2xf32>
    %cst_32 = arith.constant 1.000000e+01 : f32
    %98 = vector.broadcast %cst_32 : f32 to vector<16x2xf32>
    %99 = arith.mulf %98, %97 : vector<16x2xf32>
    %100 = arith.maximumf %85, %99 : vector<16x2xf32>
    %101 = arith.subf %85, %100 : vector<16x2xf32>
    %102 = math.exp %101 : vector<16x2xf32>
    %103 = arith.subf %99, %100 : vector<16x2xf32>
    %104 = math.exp %103 : vector<16x2xf32>
    %105 = arith.mulf %102, %91 : vector<16x2xf32>
    %106 = arith.addf %105, %104 : vector<16x2xf32>
    %107 = arith.mulf %102, %94 : vector<16x2xf32>
    %108 = arith.mulf %97, %104 : vector<16x2xf32>
    %109 = arith.addf %107, %108 : vector<16x2xf32>
    %c7 = arith.constant 7 : index
    %c0_33 = arith.constant 0 : index
    %c0_34 = arith.constant 0 : index
    %110 = vector.load %arg2[%c7, %c0_33, %c0_34] : memref<16x32x2xbf16, #tpu.memory_space<vmem>>, vector<1x32x2xbf16>
    %111 = vector.shape_cast %110 : vector<1x32x2xbf16> to vector<32x2xbf16>
    %cst_35 = arith.constant dense<0.000000e+00> : vector<16x2xf32>
    %112 = tpu.matmul %1, %111, %cst_35 {dimension_numbers = #tpu.dot_dimension_numbers<[1], [0], [0], [1], [0, 0, 1, 1], [], []>} : vector<16x32xbf16>, vector<32x2xbf16>, vector<16x2xf32> -> vector<16x2xf32>
    %cst_36 = arith.constant 1.000000e+01 : f32
    %113 = vector.broadcast %cst_36 : f32 to vector<16x2xf32>
    %114 = arith.mulf %113, %112 : vector<16x2xf32>
    %115 = arith.maximumf %100, %114 : vector<16x2xf32>
    %116 = arith.subf %100, %115 : vector<16x2xf32>
    %117 = math.exp %116 : vector<16x2xf32>
    %118 = arith.subf %114, %115 : vector<16x2xf32>
    %119 = math.exp %118 : vector<16x2xf32>
    %120 = arith.mulf %117, %106 : vector<16x2xf32>
    %121 = arith.addf %120, %119 : vector<16x2xf32>
    %122 = arith.mulf %117, %109 : vector<16x2xf32>
    %123 = arith.mulf %112, %119 : vector<16x2xf32>
    %124 = arith.addf %122, %123 : vector<16x2xf32>
    %c8 = arith.constant 8 : index
    %c0_37 = arith.constant 0 : index
    %c0_38 = arith.constant 0 : index
    %125 = vector.load %arg2[%c8, %c0_37, %c0_38] : memref<16x32x2xbf16, #tpu.memory_space<vmem>>, vector<1x32x2xbf16>
    %126 = vector.shape_cast %125 : vector<1x32x2xbf16> to vector<32x2xbf16>
    %cst_39 = arith.constant dense<0.000000e+00> : vector<16x2xf32>
    %127 = tpu.matmul %1, %126, %cst_39 {dimension_numbers = #tpu.dot_dimension_numbers<[1], [0], [0], [1], [0, 0, 1, 1], [], []>} : vector<16x32xbf16>, vector<32x2xbf16>, vector<16x2xf32> -> vector<16x2xf32>
    %cst_40 = arith.constant 1.000000e+01 : f32
    %128 = vector.broadcast %cst_40 : f32 to vector<16x2xf32>
    %129 = arith.mulf %128, %127 : vector<16x2xf32>
    %130 = arith.maximumf %115, %129 : vector<16x2xf32>
    %131 = arith.subf %115, %130 : vector<16x2xf32>
    %132 = math.exp %131 : vector<16x2xf32>
    %133 = arith.subf %129, %130 : vector<16x2xf32>
    %134 = math.exp %133 : vector<16x2xf32>
    %135 = arith.mulf %132, %121 : vector<16x2xf32>
    %136 = arith.addf %135, %134 : vector<16x2xf32>
    %137 = arith.mulf %132, %124 : vector<16x2xf32>
    %138 = arith.mulf %127, %134 : vector<16x2xf32>
    %139 = arith.addf %137, %138 : vector<16x2xf32>
    %c9 = arith.constant 9 : index
    %c0_41 = arith.constant 0 : index
    %c0_42 = arith.constant 0 : index
    %140 = vector.load %arg2[%c9, %c0_41, %c0_42] : memref<16x32x2xbf16, #tpu.memory_space<vmem>>, vector<1x32x2xbf16>
    %141 = vector.shape_cast %140 : vector<1x32x2xbf16> to vector<32x2xbf16>
    %cst_43 = arith.constant dense<0.000000e+00> : vector<16x2xf32>
    %142 = tpu.matmul %1, %141, %cst_43 {dimension_numbers = #tpu.dot_dimension_numbers<[1], [0], [0], [1], [0, 0, 1, 1], [], []>} : vector<16x32xbf16>, vector<32x2xbf16>, vector<16x2xf32> -> vector<16x2xf32>
    %cst_44 = arith.constant 1.000000e+01 : f32
    %143 = vector.broadcast %cst_44 : f32 to vector<16x2xf32>
    %144 = arith.mulf %143, %142 : vector<16x2xf32>
    %145 = arith.maximumf %130, %144 : vector<16x2xf32>
    %146 = arith.subf %130, %145 : vector<16x2xf32>
    %147 = math.exp %146 : vector<16x2xf32>
    %148 = arith.subf %144, %145 : vector<16x2xf32>
    %149 = math.exp %148 : vector<16x2xf32>
    %150 = arith.mulf %147, %136 : vector<16x2xf32>
    %151 = arith.addf %150, %149 : vector<16x2xf32>
    %152 = arith.mulf %147, %139 : vector<16x2xf32>
    %153 = arith.mulf %142, %149 : vector<16x2xf32>
    %154 = arith.addf %152, %153 : vector<16x2xf32>
    %c10 = arith.constant 10 : index
    %c0_45 = arith.constant 0 : index
    %c0_46 = arith.constant 0 : index
    %155 = vector.load %arg2[%c10, %c0_45, %c0_46] : memref<16x32x2xbf16, #tpu.memory_space<vmem>>, vector<1x32x2xbf16>
    %156 = vector.shape_cast %155 : vector<1x32x2xbf16> to vector<32x2xbf16>
    %cst_47 = arith.constant dense<0.000000e+00> : vector<16x2xf32>
    %157 = tpu.matmul %1, %156, %cst_47 {dimension_numbers = #tpu.dot_dimension_numbers<[1], [0], [0], [1], [0, 0, 1, 1], [], []>} : vector<16x32xbf16>, vector<32x2xbf16>, vector<16x2xf32> -> vector<16x2xf32>
    %cst_48 = arith.constant 1.000000e+01 : f32
    %158 = vector.broadcast %cst_48 : f32 to vector<16x2xf32>
    %159 = arith.mulf %158, %157 : vector<16x2xf32>
    %160 = arith.maximumf %145, %159 : vector<16x2xf32>
    %161 = arith.subf %145, %160 : vector<16x2xf32>
    %162 = math.exp %161 : vector<16x2xf32>
    %163 = arith.subf %159, %160 : vector<16x2xf32>
    %164 = math.exp %163 : vector<16x2xf32>
    %165 = arith.mulf %162, %151 : vector<16x2xf32>
    %166 = arith.addf %165, %164 : vector<16x2xf32>
    %167 = arith.mulf %162, %154 : vector<16x2xf32>
    %168 = arith.mulf %157, %164 : vector<16x2xf32>
    %169 = arith.addf %167, %168 : vector<16x2xf32>
    %c11 = arith.constant 11 : index
    %c0_49 = arith.constant 0 : index
    %c0_50 = arith.constant 0 : index
    %170 = vector.load %arg2[%c11, %c0_49, %c0_50] : memref<16x32x2xbf16, #tpu.memory_space<vmem>>, vector<1x32x2xbf16>
    %171 = vector.shape_cast %170 : vector<1x32x2xbf16> to vector<32x2xbf16>
    %cst_51 = arith.constant dense<0.000000e+00> : vector<16x2xf32>
    %172 = tpu.matmul %1, %171, %cst_51 {dimension_numbers = #tpu.dot_dimension_numbers<[1], [0], [0], [1], [0, 0, 1, 1], [], []>} : vector<16x32xbf16>, vector<32x2xbf16>, vector<16x2xf32> -> vector<16x2xf32>
    %cst_52 = arith.constant 1.000000e+01 : f32
    %173 = vector.broadcast %cst_52 : f32 to vector<16x2xf32>
    %174 = arith.mulf %173, %172 : vector<16x2xf32>
    %175 = arith.maximumf %160, %174 : vector<16x2xf32>
    %176 = arith.subf %160, %175 : vector<16x2xf32>
    %177 = math.exp %176 : vector<16x2xf32>
    %178 = arith.subf %174, %175 : vector<16x2xf32>
    %179 = math.exp %178 : vector<16x2xf32>
    %180 = arith.mulf %177, %166 : vector<16x2xf32>
    %181 = arith.addf %180, %179 : vector<16x2xf32>
    %182 = arith.mulf %177, %169 : vector<16x2xf32>
    %183 = arith.mulf %172, %179 : vector<16x2xf32>
    %184 = arith.addf %182, %183 : vector<16x2xf32>
    %c12 = arith.constant 12 : index
    %c0_53 = arith.constant 0 : index
    %c0_54 = arith.constant 0 : index
    %185 = vector.load %arg2[%c12, %c0_53, %c0_54] : memref<16x32x2xbf16, #tpu.memory_space<vmem>>, vector<1x32x2xbf16>
    %186 = vector.shape_cast %185 : vector<1x32x2xbf16> to vector<32x2xbf16>
    %cst_55 = arith.constant dense<0.000000e+00> : vector<16x2xf32>
    %187 = tpu.matmul %1, %186, %cst_55 {dimension_numbers = #tpu.dot_dimension_numbers<[1], [0], [0], [1], [0, 0, 1, 1], [], []>} : vector<16x32xbf16>, vector<32x2xbf16>, vector<16x2xf32> -> vector<16x2xf32>
    %cst_56 = arith.constant 1.000000e+01 : f32
    %188 = vector.broadcast %cst_56 : f32 to vector<16x2xf32>
    %189 = arith.mulf %188, %187 : vector<16x2xf32>
    %190 = arith.maximumf %175, %189 : vector<16x2xf32>
    %191 = arith.subf %175, %190 : vector<16x2xf32>
    %192 = math.exp %191 : vector<16x2xf32>
    %193 = arith.subf %189, %190 : vector<16x2xf32>
    %194 = math.exp %193 : vector<16x2xf32>
    %195 = arith.mulf %192, %181 : vector<16x2xf32>
    %196 = arith.addf %195, %194 : vector<16x2xf32>
    %197 = arith.mulf %192, %184 : vector<16x2xf32>
    %198 = arith.mulf %187, %194 : vector<16x2xf32>
    %199 = arith.addf %197, %198 : vector<16x2xf32>
    %c13 = arith.constant 13 : index
    %c0_57 = arith.constant 0 : index
    %c0_58 = arith.constant 0 : index
    %200 = vector.load %arg2[%c13, %c0_57, %c0_58] : memref<16x32x2xbf16, #tpu.memory_space<vmem>>, vector<1x32x2xbf16>
    %201 = vector.shape_cast %200 : vector<1x32x2xbf16> to vector<32x2xbf16>
    %cst_59 = arith.constant dense<0.000000e+00> : vector<16x2xf32>
    %202 = tpu.matmul %1, %201, %cst_59 {dimension_numbers = #tpu.dot_dimension_numbers<[1], [0], [0], [1], [0, 0, 1, 1], [], []>} : vector<16x32xbf16>, vector<32x2xbf16>, vector<16x2xf32> -> vector<16x2xf32>
    %cst_60 = arith.constant 1.000000e+01 : f32
    %203 = vector.broadcast %cst_60 : f32 to vector<16x2xf32>
    %204 = arith.mulf %203, %202 : vector<16x2xf32>
    %205 = arith.maximumf %190, %204 : vector<16x2xf32>
    %206 = arith.subf %190, %205 : vector<16x2xf32>
    %207 = math.exp %206 : vector<16x2xf32>
    %208 = arith.subf %204, %205 : vector<16x2xf32>
    %209 = math.exp %208 : vector<16x2xf32>
    %210 = arith.mulf %207, %196 : vector<16x2xf32>
    %211 = arith.addf %210, %209 : vector<16x2xf32>
    %212 = arith.mulf %207, %199 : vector<16x2xf32>
    %213 = arith.mulf %202, %209 : vector<16x2xf32>
    %214 = arith.addf %212, %213 : vector<16x2xf32>
    %c14 = arith.constant 14 : index
    %c0_61 = arith.constant 0 : index
    %c0_62 = arith.constant 0 : index
    %215 = vector.load %arg2[%c14, %c0_61, %c0_62] : memref<16x32x2xbf16, #tpu.memory_space<vmem>>, vector<1x32x2xbf16>
    %216 = vector.shape_cast %215 : vector<1x32x2xbf16> to vector<32x2xbf16>
    %cst_63 = arith.constant dense<0.000000e+00> : vector<16x2xf32>
    %217 = tpu.matmul %1, %216, %cst_63 {dimension_numbers = #tpu.dot_dimension_numbers<[1], [0], [0], [1], [0, 0, 1, 1], [], []>} : vector<16x32xbf16>, vector<32x2xbf16>, vector<16x2xf32> -> vector<16x2xf32>
    %cst_64 = arith.constant 1.000000e+01 : f32
    %218 = vector.broadcast %cst_64 : f32 to vector<16x2xf32>
    %219 = arith.mulf %218, %217 : vector<16x2xf32>
    %220 = arith.maximumf %205, %219 : vector<16x2xf32>
    %221 = arith.subf %205, %220 : vector<16x2xf32>
    %222 = math.exp %221 : vector<16x2xf32>
    %223 = arith.subf %219, %220 : vector<16x2xf32>
    %224 = math.exp %223 : vector<16x2xf32>
    %225 = arith.mulf %222, %211 : vector<16x2xf32>
    %226 = arith.addf %225, %224 : vector<16x2xf32>
    %227 = arith.mulf %222, %214 : vector<16x2xf32>
    %228 = arith.mulf %217, %224 : vector<16x2xf32>
    %229 = arith.addf %227, %228 : vector<16x2xf32>
    %c15 = arith.constant 15 : index
    %c0_65 = arith.constant 0 : index
    %c0_66 = arith.constant 0 : index
    %230 = vector.load %arg2[%c15, %c0_65, %c0_66] : memref<16x32x2xbf16, #tpu.memory_space<vmem>>, vector<1x32x2xbf16>
    %231 = vector.shape_cast %230 : vector<1x32x2xbf16> to vector<32x2xbf16>
    %cst_67 = arith.constant dense<0.000000e+00> : vector<16x2xf32>
    %232 = tpu.matmul %1, %231, %cst_67 {dimension_numbers = #tpu.dot_dimension_numbers<[1], [0], [0], [1], [0, 0, 1, 1], [], []>} : vector<16x32xbf16>, vector<32x2xbf16>, vector<16x2xf32> -> vector<16x2xf32>
    %cst_68 = arith.constant 1.000000e+01 : f32
    %233 = vector.broadcast %cst_68 : f32 to vector<16x2xf32>
    %234 = arith.mulf %233, %232 : vector<16x2xf32>
    %235 = arith.maximumf %220, %234 : vector<16x2xf32>
    %236 = arith.subf %220, %235 : vector<16x2xf32>
    %237 = math.exp %236 : vector<16x2xf32>
    %238 = arith.subf %234, %235 : vector<16x2xf32>
    %239 = math.exp %238 : vector<16x2xf32>
    %240 = arith.mulf %237, %226 : vector<16x2xf32>
    %241 = arith.addf %240, %239 : vector<16x2xf32>
    %242 = arith.mulf %237, %229 : vector<16x2xf32>
    %243 = arith.mulf %232, %239 : vector<16x2xf32>
    %244 = arith.addf %242, %243 : vector<16x2xf32>
    %245 = arith.divf %244, %241 : vector<16x2xf32>
    %246 = tpu.iota {dimensions = array<i32: 0>} : vector<2x2xi32>
    %247 = tpu.iota {dimensions = array<i32: 1>} : vector<2x2xi32>
    %248 = arith.cmpi eq, %246, %247 : vector<2x2xi32>
    %249 = vector.extract_strided_slice %245 {offsets = [0, 0], sizes = [2, 2], strides = [1, 1]} : vector<16x2xf32> to vector<2x2xf32>
    %cst_69 = arith.constant 0.000000e+00 : f32
    %250 = vector.broadcast %cst_69 : f32 to vector<2x2xf32>
    %251 = arith.select %248, %249, %250 : vector<2x2xi1>, vector<2x2xf32>
    %cst_70 = arith.constant dense<0.000000e+00> : vector<2xf32>
    %252 = vector.multi_reduction <add>, %251, %cst_70 [0] : vector<2x2xf32> to vector<2xf32>
    %253 = vector.shape_cast %252 : vector<2xf32> to vector<1x2xf32>
    %cst_71 = arith.constant dense<0.000000e+00> : vector<2xf32>
    %254 = vector.multi_reduction <add>, %251, %cst_71 [1] : vector<2x2xf32> to vector<2xf32>
    %255 = vector.shape_cast %254 : vector<2xf32> to vector<2x1xf32>
    %cst_72 = arith.constant 2.000000e-01 : f32
    %256 = vector.broadcast %cst_72 : f32 to vector<2x2xf32>
    %257 = arith.addf %256, %249 : vector<2x2xf32>
    %258 = vector.broadcast %253 : vector<1x2xf32> to vector<2x2xf32>
    %259 = arith.subf %257, %258 : vector<2x2xf32>
    %cst_73 = arith.constant 0.000000e+00 : f32
    %260 = vector.broadcast %cst_73 : f32 to vector<2x2xf32>
    %261 = arith.maximumf %259, %260 : vector<2x2xf32>
    %cst_74 = arith.constant 0.000000e+00 : f32
    %262 = vector.broadcast %cst_74 : f32 to vector<2x2xf32>
    %263 = arith.select %248, %262, %261 : vector<2x2xi1>, vector<2x2xf32>
    %cst_75 = arith.constant 2.000000e-01 : f32
    %264 = vector.broadcast %cst_75 : f32 to vector<2x2xf32>
    %265 = arith.addf %264, %249 : vector<2x2xf32>
    %266 = vector.broadcast %255 : vector<2x1xf32> to vector<2x2xf32>
    %267 = arith.subf %265, %266 : vector<2x2xf32>
    %cst_76 = arith.constant 0.000000e+00 : f32
    %268 = vector.broadcast %cst_76 : f32 to vector<2x2xf32>
    %269 = arith.maximumf %267, %268 : vector<2x2xf32>
    %cst_77 = arith.constant 0.000000e+00 : f32
    %270 = vector.broadcast %cst_77 : f32 to vector<2x2xf32>
    %271 = arith.select %248, %270, %269 : vector<2x2xi1>, vector<2x2xf32>
    %cst_78 = arith.constant dense<0xFF800000> : vector<2xf32>
    %272 = vector.multi_reduction <maximumf>, %263, %cst_78 [0] : vector<2x2xf32> to vector<2xf32>
    %cst_79 = arith.constant dense<0xFF800000> : vector<2xf32>
    %273 = vector.multi_reduction <maximumf>, %271, %cst_79 [1] : vector<2x2xf32> to vector<2xf32>
    %274 = arith.addf %272, %273 : vector<2xf32>
    %c0_80 = arith.constant 0 : index
    %c0_81 = arith.constant 0 : index
    %c0_82 = arith.constant 0 : index
    %275 = vector.load %arg3[%c0_80, %c0_81, %c0_82] : memref<1x8x2xf32, #tpu.memory_space<vmem>>, vector<1x1x2xf32>
    %276 = vector.shape_cast %275 : vector<1x1x2xf32> to vector<2xf32>
    %277 = vector.shape_cast %274 : vector<2xf32> to vector<1x1x2xf32>
    tpu.vector_store %arg3[%c0_80, %c0_81, %c0_82], %277 {strides = array<i32>} : memref<1x8x2xf32, #tpu.memory_space<vmem>>, vector<1x1x2xf32>,
    %278 = vector.extract_strided_slice %245 {offsets = [2, 0], sizes = [2, 2], strides = [1, 1]} : vector<16x2xf32> to vector<2x2xf32>
    %cst_83 = arith.constant 0.000000e+00 : f32
    %279 = vector.broadcast %cst_83 : f32 to vector<2x2xf32>
    %280 = arith.select %248, %278, %279 : vector<2x2xi1>, vector<2x2xf32>
    %cst_84 = arith.constant dense<0.000000e+00> : vector<2xf32>
    %281 = vector.multi_reduction <add>, %280, %cst_84 [0] : vector<2x2xf32> to vector<2xf32>
    %282 = vector.shape_cast %281 : vector<2xf32> to vector<1x2xf32>
    %cst_85 = arith.constant dense<0.000000e+00> : vector<2xf32>
    %283 = vector.multi_reduction <add>, %280, %cst_85 [1] : vector<2x2xf32> to vector<2xf32>
    %284 = vector.shape_cast %283 : vector<2xf32> to vector<2x1xf32>
    %cst_86 = arith.constant 2.000000e-01 : f32
    %285 = vector.broadcast %cst_86 : f32 to vector<2x2xf32>
    %286 = arith.addf %285, %278 : vector<2x2xf32>
    %287 = vector.broadcast %282 : vector<1x2xf32> to vector<2x2xf32>
    %288 = arith.subf %286, %287 : vector<2x2xf32>
    %cst_87 = arith.constant 0.000000e+00 : f32
    %289 = vector.broadcast %cst_87 : f32 to vector<2x2xf32>
    %290 = arith.maximumf %288, %289 : vector<2x2xf32>
    %cst_88 = arith.constant 0.000000e+00 : f32
    %291 = vector.broadcast %cst_88 : f32 to vector<2x2xf32>
    %292 = arith.select %248, %291, %290 : vector<2x2xi1>, vector<2x2xf32>
    %cst_89 = arith.constant 2.000000e-01 : f32
    %293 = vector.broadcast %cst_89 : f32 to vector<2x2xf32>
    %294 = arith.addf %293, %278 : vector<2x2xf32>
    %295 = vector.broadcast %284 : vector<2x1xf32> to vector<2x2xf32>
    %296 = arith.subf %294, %295 : vector<2x2xf32>
    %cst_90 = arith.constant 0.000000e+00 : f32
    %297 = vector.broadcast %cst_90 : f32 to vector<2x2xf32>
    %298 = arith.maximumf %296, %297 : vector<2x2xf32>
    %cst_91 = arith.constant 0.000000e+00 : f32
    %299 = vector.broadcast %cst_91 : f32 to vector<2x2xf32>
    %300 = arith.select %248, %299, %298 : vector<2x2xi1>, vector<2x2xf32>
    %cst_92 = arith.constant dense<0xFF800000> : vector<2xf32>
    %301 = vector.multi_reduction <maximumf>, %292, %cst_92 [0] : vector<2x2xf32> to vector<2xf32>
    %cst_93 = arith.constant dense<0xFF800000> : vector<2xf32>
    %302 = vector.multi_reduction <maximumf>, %300, %cst_93 [1] : vector<2x2xf32> to vector<2xf32>
    %303 = arith.addf %301, %302 : vector<2xf32>
    %c0_94 = arith.constant 0 : index
    %c1_95 = arith.constant 1 : index
    %c0_96 = arith.constant 0 : index
    %304 = vector.load %arg3[%c0_94, %c1_95, %c0_96] : memref<1x8x2xf32, #tpu.memory_space<vmem>>, vector<1x1x2xf32>
    %305 = vector.shape_cast %304 : vector<1x1x2xf32> to vector<2xf32>
    %306 = vector.shape_cast %303 : vector<2xf32> to vector<1x1x2xf32>
    tpu.vector_store %arg3[%c0_94, %c1_95, %c0_96], %306 {strides = array<i32>} : memref<1x8x2xf32, #tpu.memory_space<vmem>>, vector<1x1x2xf32>,
    %307 = vector.extract_strided_slice %245 {offsets = [4, 0], sizes = [2, 2], strides = [1, 1]} : vector<16x2xf32> to vector<2x2xf32>
    %cst_97 = arith.constant 0.000000e+00 : f32
    %308 = vector.broadcast %cst_97 : f32 to vector<2x2xf32>
    %309 = arith.select %248, %307, %308 : vector<2x2xi1>, vector<2x2xf32>
    %cst_98 = arith.constant dense<0.000000e+00> : vector<2xf32>
    %310 = vector.multi_reduction <add>, %309, %cst_98 [0] : vector<2x2xf32> to vector<2xf32>
    %311 = vector.shape_cast %310 : vector<2xf32> to vector<1x2xf32>
    %cst_99 = arith.constant dense<0.000000e+00> : vector<2xf32>
    %312 = vector.multi_reduction <add>, %309, %cst_99 [1] : vector<2x2xf32> to vector<2xf32>
    %313 = vector.shape_cast %312 : vector<2xf32> to vector<2x1xf32>
    %cst_100 = arith.constant 2.000000e-01 : f32
    %314 = vector.broadcast %cst_100 : f32 to vector<2x2xf32>
    %315 = arith.addf %314, %307 : vector<2x2xf32>
    %316 = vector.broadcast %311 : vector<1x2xf32> to vector<2x2xf32>
    %317 = arith.subf %315, %316 : vector<2x2xf32>
    %cst_101 = arith.constant 0.000000e+00 : f32
    %318 = vector.broadcast %cst_101 : f32 to vector<2x2xf32>
    %319 = arith.maximumf %317, %318 : vector<2x2xf32>
    %cst_102 = arith.constant 0.000000e+00 : f32
    %320 = vector.broadcast %cst_102 : f32 to vector<2x2xf32>
    %321 = arith.select %248, %320, %319 : vector<2x2xi1>, vector<2x2xf32>
    %cst_103 = arith.constant 2.000000e-01 : f32
    %322 = vector.broadcast %cst_103 : f32 to vector<2x2xf32>
    %323 = arith.addf %322, %307 : vector<2x2xf32>
    %324 = vector.broadcast %313 : vector<2x1xf32> to vector<2x2xf32>
    %325 = arith.subf %323, %324 : vector<2x2xf32>
    %cst_104 = arith.constant 0.000000e+00 : f32
    %326 = vector.broadcast %cst_104 : f32 to vector<2x2xf32>
    %327 = arith.maximumf %325, %326 : vector<2x2xf32>
    %cst_105 = arith.constant 0.000000e+00 : f32
    %328 = vector.broadcast %cst_105 : f32 to vector<2x2xf32>
    %329 = arith.select %248, %328, %327 : vector<2x2xi1>, vector<2x2xf32>
    %cst_106 = arith.constant dense<0xFF800000> : vector<2xf32>
    %330 = vector.multi_reduction <maximumf>, %321, %cst_106 [0] : vector<2x2xf32> to vector<2xf32>
    %cst_107 = arith.constant dense<0xFF800000> : vector<2xf32>
    %331 = vector.multi_reduction <maximumf>, %329, %cst_107 [1] : vector<2x2xf32> to vector<2xf32>
    %332 = arith.addf %330, %331 : vector<2xf32>
    %c0_108 = arith.constant 0 : index
    %c2_109 = arith.constant 2 : index
    %c0_110 = arith.constant 0 : index
    %333 = vector.load %arg3[%c0_108, %c2_109, %c0_110] : memref<1x8x2xf32, #tpu.memory_space<vmem>>, vector<1x1x2xf32>
    %334 = vector.shape_cast %333 : vector<1x1x2xf32> to vector<2xf32>
    %335 = vector.shape_cast %332 : vector<2xf32> to vector<1x1x2xf32>
    tpu.vector_store %arg3[%c0_108, %c2_109, %c0_110], %335 {strides = array<i32>} : memref<1x8x2xf32, #tpu.memory_space<vmem>>, vector<1x1x2xf32>,
    %336 = vector.extract_strided_slice %245 {offsets = [6, 0], sizes = [2, 2], strides = [1, 1]} : vector<16x2xf32> to vector<2x2xf32>
    %cst_111 = arith.constant 0.000000e+00 : f32
    %337 = vector.broadcast %cst_111 : f32 to vector<2x2xf32>
    %338 = arith.select %248, %336, %337 : vector<2x2xi1>, vector<2x2xf32>
    %cst_112 = arith.constant dense<0.000000e+00> : vector<2xf32>
    %339 = vector.multi_reduction <add>, %338, %cst_112 [0] : vector<2x2xf32> to vector<2xf32>
    %340 = vector.shape_cast %339 : vector<2xf32> to vector<1x2xf32>
    %cst_113 = arith.constant dense<0.000000e+00> : vector<2xf32>
    %341 = vector.multi_reduction <add>, %338, %cst_113 [1] : vector<2x2xf32> to vector<2xf32>
    %342 = vector.shape_cast %341 : vector<2xf32> to vector<2x1xf32>
    %cst_114 = arith.constant 2.000000e-01 : f32
    %343 = vector.broadcast %cst_114 : f32 to vector<2x2xf32>
    %344 = arith.addf %343, %336 : vector<2x2xf32>
    %345 = vector.broadcast %340 : vector<1x2xf32> to vector<2x2xf32>
    %346 = arith.subf %344, %345 : vector<2x2xf32>
    %cst_115 = arith.constant 0.000000e+00 : f32
    %347 = vector.broadcast %cst_115 : f32 to vector<2x2xf32>
    %348 = arith.maximumf %346, %347 : vector<2x2xf32>
    %cst_116 = arith.constant 0.000000e+00 : f32
    %349 = vector.broadcast %cst_116 : f32 to vector<2x2xf32>
    %350 = arith.select %248, %349, %348 : vector<2x2xi1>, vector<2x2xf32>
    %cst_117 = arith.constant 2.000000e-01 : f32
    %351 = vector.broadcast %cst_117 : f32 to vector<2x2xf32>
    %352 = arith.addf %351, %336 : vector<2x2xf32>
    %353 = vector.broadcast %342 : vector<2x1xf32> to vector<2x2xf32>
    %354 = arith.subf %352, %353 : vector<2x2xf32>
    %cst_118 = arith.constant 0.000000e+00 : f32
    %355 = vector.broadcast %cst_118 : f32 to vector<2x2xf32>
    %356 = arith.maximumf %354, %355 : vector<2x2xf32>
    %cst_119 = arith.constant 0.000000e+00 : f32
    %357 = vector.broadcast %cst_119 : f32 to vector<2x2xf32>
    %358 = arith.select %248, %357, %356 : vector<2x2xi1>, vector<2x2xf32>
    %cst_120 = arith.constant dense<0xFF800000> : vector<2xf32>
    %359 = vector.multi_reduction <maximumf>, %350, %cst_120 [0] : vector<2x2xf32> to vector<2xf32>
    %cst_121 = arith.constant dense<0xFF800000> : vector<2xf32>
    %360 = vector.multi_reduction <maximumf>, %358, %cst_121 [1] : vector<2x2xf32> to vector<2xf32>
    %361 = arith.addf %359, %360 : vector<2xf32>
    %c0_122 = arith.constant 0 : index
    %c3_123 = arith.constant 3 : index
    %c0_124 = arith.constant 0 : index
    %362 = vector.load %arg3[%c0_122, %c3_123, %c0_124] : memref<1x8x2xf32, #tpu.memory_space<vmem>>, vector<1x1x2xf32>
    %363 = vector.shape_cast %362 : vector<1x1x2xf32> to vector<2xf32>
    %364 = vector.shape_cast %361 : vector<2xf32> to vector<1x1x2xf32>
    tpu.vector_store %arg3[%c0_122, %c3_123, %c0_124], %364 {strides = array<i32>} : memref<1x8x2xf32, #tpu.memory_space<vmem>>, vector<1x1x2xf32>,
    %365 = vector.extract_strided_slice %245 {offsets = [8, 0], sizes = [2, 2], strides = [1, 1]} : vector<16x2xf32> to vector<2x2xf32>
    %cst_125 = arith.constant 0.000000e+00 : f32
    %366 = vector.broadcast %cst_125 : f32 to vector<2x2xf32>
    %367 = arith.select %248, %365, %366 : vector<2x2xi1>, vector<2x2xf32>
    %cst_126 = arith.constant dense<0.000000e+00> : vector<2xf32>
    %368 = vector.multi_reduction <add>, %367, %cst_126 [0] : vector<2x2xf32> to vector<2xf32>
    %369 = vector.shape_cast %368 : vector<2xf32> to vector<1x2xf32>
    %cst_127 = arith.constant dense<0.000000e+00> : vector<2xf32>
    %370 = vector.multi_reduction <add>, %367, %cst_127 [1] : vector<2x2xf32> to vector<2xf32>
    %371 = vector.shape_cast %370 : vector<2xf32> to vector<2x1xf32>
    %cst_128 = arith.constant 2.000000e-01 : f32
    %372 = vector.broadcast %cst_128 : f32 to vector<2x2xf32>
    %373 = arith.addf %372, %365 : vector<2x2xf32>
    %374 = vector.broadcast %369 : vector<1x2xf32> to vector<2x2xf32>
    %375 = arith.subf %373, %374 : vector<2x2xf32>
    %cst_129 = arith.constant 0.000000e+00 : f32
    %376 = vector.broadcast %cst_129 : f32 to vector<2x2xf32>
    %377 = arith.maximumf %375, %376 : vector<2x2xf32>
    %cst_130 = arith.constant 0.000000e+00 : f32
    %378 = vector.broadcast %cst_130 : f32 to vector<2x2xf32>
    %379 = arith.select %248, %378, %377 : vector<2x2xi1>, vector<2x2xf32>
    %cst_131 = arith.constant 2.000000e-01 : f32
    %380 = vector.broadcast %cst_131 : f32 to vector<2x2xf32>
    %381 = arith.addf %380, %365 : vector<2x2xf32>
    %382 = vector.broadcast %371 : vector<2x1xf32> to vector<2x2xf32>
    %383 = arith.subf %381, %382 : vector<2x2xf32>
    %cst_132 = arith.constant 0.000000e+00 : f32
    %384 = vector.broadcast %cst_132 : f32 to vector<2x2xf32>
    %385 = arith.maximumf %383, %384 : vector<2x2xf32>
    %cst_133 = arith.constant 0.000000e+00 : f32
    %386 = vector.broadcast %cst_133 : f32 to vector<2x2xf32>
    %387 = arith.select %248, %386, %385 : vector<2x2xi1>, vector<2x2xf32>
    %cst_134 = arith.constant dense<0xFF800000> : vector<2xf32>
    %388 = vector.multi_reduction <maximumf>, %379, %cst_134 [0] : vector<2x2xf32> to vector<2xf32>
    %cst_135 = arith.constant dense<0xFF800000> : vector<2xf32>
    %389 = vector.multi_reduction <maximumf>, %387, %cst_135 [1] : vector<2x2xf32> to vector<2xf32>
    %390 = arith.addf %388, %389 : vector<2xf32>
    %c0_136 = arith.constant 0 : index
    %c4_137 = arith.constant 4 : index
    %c0_138 = arith.constant 0 : index
    %391 = vector.load %arg3[%c0_136, %c4_137, %c0_138] : memref<1x8x2xf32, #tpu.memory_space<vmem>>, vector<1x1x2xf32>
    %392 = vector.shape_cast %391 : vector<1x1x2xf32> to vector<2xf32>
    %393 = vector.shape_cast %390 : vector<2xf32> to vector<1x1x2xf32>
    tpu.vector_store %arg3[%c0_136, %c4_137, %c0_138], %393 {strides = array<i32>} : memref<1x8x2xf32, #tpu.memory_space<vmem>>, vector<1x1x2xf32>,
    %394 = vector.extract_strided_slice %245 {offsets = [10, 0], sizes = [2, 2], strides = [1, 1]} : vector<16x2xf32> to vector<2x2xf32>
    %cst_139 = arith.constant 0.000000e+00 : f32
    %395 = vector.broadcast %cst_139 : f32 to vector<2x2xf32>
    %396 = arith.select %248, %394, %395 : vector<2x2xi1>, vector<2x2xf32>
    %cst_140 = arith.constant dense<0.000000e+00> : vector<2xf32>
    %397 = vector.multi_reduction <add>, %396, %cst_140 [0] : vector<2x2xf32> to vector<2xf32>
    %398 = vector.shape_cast %397 : vector<2xf32> to vector<1x2xf32>
    %cst_141 = arith.constant dense<0.000000e+00> : vector<2xf32>
    %399 = vector.multi_reduction <add>, %396, %cst_141 [1] : vector<2x2xf32> to vector<2xf32>
    %400 = vector.shape_cast %399 : vector<2xf32> to vector<2x1xf32>
    %cst_142 = arith.constant 2.000000e-01 : f32
    %401 = vector.broadcast %cst_142 : f32 to vector<2x2xf32>
    %402 = arith.addf %401, %394 : vector<2x2xf32>
    %403 = vector.broadcast %398 : vector<1x2xf32> to vector<2x2xf32>
    %404 = arith.subf %402, %403 : vector<2x2xf32>
    %cst_143 = arith.constant 0.000000e+00 : f32
    %405 = vector.broadcast %cst_143 : f32 to vector<2x2xf32>
    %406 = arith.maximumf %404, %405 : vector<2x2xf32>
    %cst_144 = arith.constant 0.000000e+00 : f32
    %407 = vector.broadcast %cst_144 : f32 to vector<2x2xf32>
    %408 = arith.select %248, %407, %406 : vector<2x2xi1>, vector<2x2xf32>
    %cst_145 = arith.constant 2.000000e-01 : f32
    %409 = vector.broadcast %cst_145 : f32 to vector<2x2xf32>
    %410 = arith.addf %409, %394 : vector<2x2xf32>
    %411 = vector.broadcast %400 : vector<2x1xf32> to vector<2x2xf32>
    %412 = arith.subf %410, %411 : vector<2x2xf32>
    %cst_146 = arith.constant 0.000000e+00 : f32
    %413 = vector.broadcast %cst_146 : f32 to vector<2x2xf32>
    %414 = arith.maximumf %412, %413 : vector<2x2xf32>
    %cst_147 = arith.constant 0.000000e+00 : f32
    %415 = vector.broadcast %cst_147 : f32 to vector<2x2xf32>
    %416 = arith.select %248, %415, %414 : vector<2x2xi1>, vector<2x2xf32>
    %cst_148 = arith.constant dense<0xFF800000> : vector<2xf32>
    %417 = vector.multi_reduction <maximumf>, %408, %cst_148 [0] : vector<2x2xf32> to vector<2xf32>
    %cst_149 = arith.constant dense<0xFF800000> : vector<2xf32>
    %418 = vector.multi_reduction <maximumf>, %416, %cst_149 [1] : vector<2x2xf32> to vector<2xf32>
    %419 = arith.addf %417, %418 : vector<2xf32>
    %c0_150 = arith.constant 0 : index
    %c5_151 = arith.constant 5 : index
    %c0_152 = arith.constant 0 : index
    %420 = vector.load %arg3[%c0_150, %c5_151, %c0_152] : memref<1x8x2xf32, #tpu.memory_space<vmem>>, vector<1x1x2xf32>
    %421 = vector.shape_cast %420 : vector<1x1x2xf32> to vector<2xf32>
    %422 = vector.shape_cast %419 : vector<2xf32> to vector<1x1x2xf32>
    tpu.vector_store %arg3[%c0_150, %c5_151, %c0_152], %422 {strides = array<i32>} : memref<1x8x2xf32, #tpu.memory_space<vmem>>, vector<1x1x2xf32>,
    %423 = vector.extract_strided_slice %245 {offsets = [12, 0], sizes = [2, 2], strides = [1, 1]} : vector<16x2xf32> to vector<2x2xf32>
    %cst_153 = arith.constant 0.000000e+00 : f32
    %424 = vector.broadcast %cst_153 : f32 to vector<2x2xf32>
    %425 = arith.select %248, %423, %424 : vector<2x2xi1>, vector<2x2xf32>
    %cst_154 = arith.constant dense<0.000000e+00> : vector<2xf32>
    %426 = vector.multi_reduction <add>, %425, %cst_154 [0] : vector<2x2xf32> to vector<2xf32>
    %427 = vector.shape_cast %426 : vector<2xf32> to vector<1x2xf32>
    %cst_155 = arith.constant dense<0.000000e+00> : vector<2xf32>
    %428 = vector.multi_reduction <add>, %425, %cst_155 [1] : vector<2x2xf32> to vector<2xf32>
    %429 = vector.shape_cast %428 : vector<2xf32> to vector<2x1xf32>
    %cst_156 = arith.constant 2.000000e-01 : f32
    %430 = vector.broadcast %cst_156 : f32 to vector<2x2xf32>
    %431 = arith.addf %430, %423 : vector<2x2xf32>
    %432 = vector.broadcast %427 : vector<1x2xf32> to vector<2x2xf32>
    %433 = arith.subf %431, %432 : vector<2x2xf32>
    %cst_157 = arith.constant 0.000000e+00 : f32
    %434 = vector.broadcast %cst_157 : f32 to vector<2x2xf32>
    %435 = arith.maximumf %433, %434 : vector<2x2xf32>
    %cst_158 = arith.constant 0.000000e+00 : f32
    %436 = vector.broadcast %cst_158 : f32 to vector<2x2xf32>
    %437 = arith.select %248, %436, %435 : vector<2x2xi1>, vector<2x2xf32>
    %cst_159 = arith.constant 2.000000e-01 : f32
    %438 = vector.broadcast %cst_159 : f32 to vector<2x2xf32>
    %439 = arith.addf %438, %423 : vector<2x2xf32>
    %440 = vector.broadcast %429 : vector<2x1xf32> to vector<2x2xf32>
    %441 = arith.subf %439, %440 : vector<2x2xf32>
    %cst_160 = arith.constant 0.000000e+00 : f32
    %442 = vector.broadcast %cst_160 : f32 to vector<2x2xf32>
    %443 = arith.maximumf %441, %442 : vector<2x2xf32>
    %cst_161 = arith.constant 0.000000e+00 : f32
    %444 = vector.broadcast %cst_161 : f32 to vector<2x2xf32>
    %445 = arith.select %248, %444, %443 : vector<2x2xi1>, vector<2x2xf32>
    %cst_162 = arith.constant dense<0xFF800000> : vector<2xf32>
    %446 = vector.multi_reduction <maximumf>, %437, %cst_162 [0] : vector<2x2xf32> to vector<2xf32>
    %cst_163 = arith.constant dense<0xFF800000> : vector<2xf32>
    %447 = vector.multi_reduction <maximumf>, %445, %cst_163 [1] : vector<2x2xf32> to vector<2xf32>
    %448 = arith.addf %446, %447 : vector<2xf32>
    %c0_164 = arith.constant 0 : index
    %c6_165 = arith.constant 6 : index
    %c0_166 = arith.constant 0 : index
    %449 = vector.load %arg3[%c0_164, %c6_165, %c0_166] : memref<1x8x2xf32, #tpu.memory_space<vmem>>, vector<1x1x2xf32>
    %450 = vector.shape_cast %449 : vector<1x1x2xf32> to vector<2xf32>
    %451 = vector.shape_cast %448 : vector<2xf32> to vector<1x1x2xf32>
    tpu.vector_store %arg3[%c0_164, %c6_165, %c0_166], %451 {strides = array<i32>} : memref<1x8x2xf32, #tpu.memory_space<vmem>>, vector<1x1x2xf32>,
    %452 = vector.extract_strided_slice %245 {offsets = [14, 0], sizes = [2, 2], strides = [1, 1]} : vector<16x2xf32> to vector<2x2xf32>
    %cst_167 = arith.constant 0.000000e+00 : f32
    %453 = vector.broadcast %cst_167 : f32 to vector<2x2xf32>
    %454 = arith.select %248, %452, %453 : vector<2x2xi1>, vector<2x2xf32>
    %cst_168 = arith.constant dense<0.000000e+00> : vector<2xf32>
    %455 = vector.multi_reduction <add>, %454, %cst_168 [0] : vector<2x2xf32> to vector<2xf32>
    %456 = vector.shape_cast %455 : vector<2xf32> to vector<1x2xf32>
    %cst_169 = arith.constant dense<0.000000e+00> : vector<2xf32>
    %457 = vector.multi_reduction <add>, %454, %cst_169 [1] : vector<2x2xf32> to vector<2xf32>
    %458 = vector.shape_cast %457 : vector<2xf32> to vector<2x1xf32>
    %cst_170 = arith.constant 2.000000e-01 : f32
    %459 = vector.broadcast %cst_170 : f32 to vector<2x2xf32>
    %460 = arith.addf %459, %452 : vector<2x2xf32>
    %461 = vector.broadcast %456 : vector<1x2xf32> to vector<2x2xf32>
    %462 = arith.subf %460, %461 : vector<2x2xf32>
    %cst_171 = arith.constant 0.000000e+00 : f32
    %463 = vector.broadcast %cst_171 : f32 to vector<2x2xf32>
    %464 = arith.maximumf %462, %463 : vector<2x2xf32>
    %cst_172 = arith.constant 0.000000e+00 : f32
    %465 = vector.broadcast %cst_172 : f32 to vector<2x2xf32>
    %466 = arith.select %248, %465, %464 : vector<2x2xi1>, vector<2x2xf32>
    %cst_173 = arith.constant 2.000000e-01 : f32
    %467 = vector.broadcast %cst_173 : f32 to vector<2x2xf32>
    %468 = arith.addf %467, %452 : vector<2x2xf32>
    %469 = vector.broadcast %458 : vector<2x1xf32> to vector<2x2xf32>
    %470 = arith.subf %468, %469 : vector<2x2xf32>
    %cst_174 = arith.constant 0.000000e+00 : f32
    %471 = vector.broadcast %cst_174 : f32 to vector<2x2xf32>
    %472 = arith.maximumf %470, %471 : vector<2x2xf32>
    %cst_175 = arith.constant 0.000000e+00 : f32
    %473 = vector.broadcast %cst_175 : f32 to vector<2x2xf32>
    %474 = arith.select %248, %473, %472 : vector<2x2xi1>, vector<2x2xf32>
    %cst_176 = arith.constant dense<0xFF800000> : vector<2xf32>
    %475 = vector.multi_reduction <maximumf>, %466, %cst_176 [0] : vector<2x2xf32> to vector<2xf32>
    %cst_177 = arith.constant dense<0xFF800000> : vector<2xf32>
    %476 = vector.multi_reduction <maximumf>, %474, %cst_177 [1] : vector<2x2xf32> to vector<2xf32>
    %477 = arith.addf %475, %476 : vector<2xf32>
    %c0_178 = arith.constant 0 : index
    %c7_179 = arith.constant 7 : index
    %c0_180 = arith.constant 0 : index
    %478 = vector.load %arg3[%c0_178, %c7_179, %c0_180] : memref<1x8x2xf32, #tpu.memory_space<vmem>>, vector<1x1x2xf32>
    %479 = vector.shape_cast %478 : vector<1x1x2xf32> to vector<2xf32>
    %480 = vector.shape_cast %477 : vector<2xf32> to vector<1x1x2xf32>
    tpu.vector_store %arg3[%c0_178, %c7_179, %c0_180], %480 {strides = array<i32>} : memref<1x8x2xf32, #tpu.memory_space<vmem>>, vector<1x1x2xf32>,
    return
  }
  func.func @transform_0(%arg0: i32) -> (i32, i32, i32) {
    %c0_i32 = arith.constant 0 : i32
    %c0_i32_0 = arith.constant 0 : i32
    %c0_i32_1 = arith.constant 0 : i32
    return %arg0, %c0_i32, %c0_i32_0 : i32, i32, i32
  }
  func.func @transform_1(%arg0: i32) -> (i32, i32, i32) {
    %c0_i32 = arith.constant 0 : i32
    %c0_i32_0 = arith.constant 0 : i32
    %c0_i32_1 = arith.constant 0 : i32
    %c0_i32_2 = arith.constant 0 : i32
    return %c0_i32, %c0_i32_0, %c0_i32_1 : i32, i32, i32
  }
  func.func @transform_2(%arg0: i32) -> (i32, i32, i32) {
    %c0_i32 = arith.constant 0 : i32
    %c0_i32_0 = arith.constant 0 : i32
    %c0_i32_1 = arith.constant 0 : i32
    return %arg0, %c0_i32, %c0_i32_0 : i32, i32, i32
  }
}

</mosaic_0001>

<llo_original>
// kernel: grounding_forward_loss.1
$region0: #{grounding_forward_loss.1}
  #allocation0 [shape = 'u32[]', space=smem, size = 0x4, offset = 0x4, fixed_abs, tag = 'smem constant byte address 0x4 - core index']
  #allocation1 [shape = 'u32[144,128]{1,0:T(1,128)}', space=vmem, size = 0x12000, scoped, tag = 'internal scratch']
  %s0 = inlined_call_operand.vmem [shape: bf16[1,16,32], index: 0, kind: input, shape index: {}]
  %s1 = inlined_call_operand.vmem [shape: bf16[16,32,2], index: 1, kind: input, shape index: {}]
  %s2 = inlined_call_operand.vmem [shape: f32[1,8,2], index: 2, kind: output, shape index: {}]
  %s3 = sld [smem:[#allocation0]]
  $region18: #{grounding_forward_loss.1} parent=0
    _
  %s5 = ssub.s32 1, %s3
  %s6 = scalar_select 0, %s5, %s3
  // Predicated region
  $region2: #{grounding_forward_loss.1} parent=0 // pred_check
    _
  $region3: #{grounding_forward_loss.1} parent=0 // pred_check_branch
    %8 = sbr.rel (0) target = $region5
  $region4: #{grounding_forward_loss.1} parent=0 // pred_region
    _
  $region5: #{grounding_forward_loss.1} parent=0 // pred_fallthru
    _
  // Predicated region
  $region6: #{grounding_forward_loss.1} parent=0 // pred_check
    _
  $region7: #{grounding_forward_loss.1} parent=0 // pred_check_branch
    %10 = sbr.rel (0) target = $region9
  $region8: #{grounding_forward_loss.1} parent=0 // pred_region
    _
  $region9: #{grounding_forward_loss.1} parent=0 // pred_fallthru
    _
  %v12 = vld [vmem:[%s0] sm:$0xf]
  %v13 = vld [vmem:[%s0 + $0x4] sm:$0xf]
  %v14 = vld [vmem:[%s1] sm:$0xf]
  %v15 = vld [vmem:[%s1 + $0x4] sm:$0xf]
  %v16 = vld [vmem:[%s1 + $0x8] sm:$0xf]
  %v17 = vld [vmem:[%s1 + $0xc] sm:$0xf]
  %v20 = vunpack.c.l.b16 %v12
  %v21 = vunpack.c.l.b16 %v13
  %v22 = vpack.c.b16 %v21, %v20
  %v27 = vunpack.c.l.b16 %v14
  %v28 = vunpack.c.l.b16 %v15
  %v29 = vunpack.c.l.b16 %v16
  %v30 = vunpack.c.l.b16 %v17
  %v31 = vpack.c.b16 %v28, %v27
  %v32 = vpack.c.b16 %v30, %v29
  %vm35 = vcmask 261120
  %v37 = vsel %vm35, %v22, 0
  %39 = vmatprep.subr.bf16.mxu0 0
  %40 = vmatpush1.bf16.msra.mxu0 0
  %41 = vmatprep.subr.bf16.mxu0 0
  %42 = vmatpush1.bf16.msra.mxu0 0
  %43 = vmatprep.subr.bf16.mxu0 0
  %44 = vmatpush1.bf16.msra.mxu0 0
  %45 = vmatprep.subr.bf16.mxu0 0
  %46 = vmatpush1.bf16.msra.mxu0 0
  %47 = vmatprep.subr.bf16.mxu0 0
  %48 = vmatpush1.bf16.msra.mxu0 0
  %49 = vmatprep.subr.bf16.mxu0 0
  %50 = vmatpush1.bf16.msra.mxu0 0
  %51 = vmatprep.subr.bf16.mxu0 0
  %52 = vmatpush1.bf16.msra.mxu0 %v32
  %53 = vmatprep.subr.bf16.mxu0 0
  %54 = vmatpush1.bf16.msra.mxu0 %v31
  %55 = vmatprep.subr.bf16.mxu0 0
  %56 = vmatpush2.bf16.msra.mxu0 0
  %57 = vmatprep.subr.bf16.mxu0 0
  %58 = vmatpush2.bf16.msra.mxu0 0
  %59 = vmatprep.subr.bf16.mxu0 0
  %60 = vmatpush2.bf16.msra.mxu0 0
  %61 = vmatprep.subr.bf16.mxu0 0
  %62 = vmatpush2.bf16.msra.mxu0 0
  %63 = vmatprep.subr.bf16.mxu0 0
  %64 = vmatpush2.bf16.msra.mxu0 0
  %65 = vmatprep.subr.bf16.mxu0 0
  %66 = vmatpush2.bf16.msra.mxu0 0
  %67 = vmatprep.subr.bf16.mxu0 0
  %68 = vmatpush2.bf16.msra.mxu0 0
  %69 = vmatprep.subr.bf16.mxu0 0
  %70 = vmatpush2.bf16.msra.mxu0 0
  %71 = vmatprep.mubr.bf16.mxu0 0
  %72 = vmatmul.mubr.bf16.gmra.mxu0 %v37
  %v73 = vpop.f32.mrf.mxu0
  %v74 = vadd.f32 0.0, %v73
  %v75 = vpop.f32.mrf.mxu0
  %v76 = vpop.f32.mrf.mxu0
  %v77 = vadd.f32 0.0, %v76
  %v78 = vpop.f32.mrf.mxu0
  %79 = vdwg.mxu0
  %v80 = vmul.f32 %v74, 10.0
  %v81 = vmul.f32 %v77, 10.0
  %v82 = vsub.f32 -inf, %v80
  %v83 = vsub.f32 -inf, %v81
  %v84 = vmul.f32 %v82, 1.442695
  %v85 = vpow.pop %v84
  %v86 = vmul.f32 %v83, 1.442695
  %v87 = vpow.pop %v86
  %v88 = vsub.f32 %v80, %v80
  %v89 = vsub.f32 %v81, %v81
  %v90 = vmul.f32 %v88, 1.442695
  %v91 = vpow.pop %v90
  %v92 = vmul.f32 %v89, 1.442695
  %v93 = vpow.pop %v92
  %v94 = vmul.f32 %v85, 0.0
  %v95 = vmul.f32 %v87, 0.0
  %v96 = vadd.f32 %v94, %v91
  %v97 = vadd.f32 %v95, %v93
  %v98 = vmul.f32 %v74, %v91
  %v99 = vmul.f32 %v77, %v93
  %v100 = vadd.f32 %v94, %v98
  %v101 = vadd.f32 %v95, %v99
  %s102 = scalar_lea.vmem %s1, 16
  %v103 = vld [vmem:[%s102] sm:$0xf]
  %v104 = vld [vmem:[%s102 + $0x4] sm:$0xf]
  %v105 = vld [vmem:[%s102 + $0x8] sm:$0xf]
  %v106 = vld [vmem:[%s102 + $0xc] sm:$0xf]
  %v111 = vunpack.c.l.b16 %v103
  %v112 = vunpack.c.l.b16 %v104
  %v113 = vunpack.c.l.b16 %v105
  %v114 = vunpack.c.l.b16 %v106
  %v115 = vpack.c.b16 %v112, %v111
  %v116 = vpack.c.b16 %v114, %v113
  %119 = vmatprep.subr.bf16.mxu0 0
  %120 = vmatpush1.bf16.msra.mxu0 0
  %121 = vmatprep.subr.bf16.mxu0 0
  %122 = vmatpush1.bf16.msra.mxu0 0
  %123 = vmatprep.subr.bf16.mxu0 0
  %124 = vmatpush1.bf16.msra.mxu0 0
  %125 = vmatprep.subr.bf16.mxu0 0
  %126 = vmatpush1.bf16.msra.mxu0 0
  %127 = vmatprep.subr.bf16.mxu0 0
  %128 = vmatpush1.bf16.msra.mxu0 0
  %129 = vmatprep.subr.bf16.mxu0 0
  %130 = vmatpush1.bf16.msra.mxu0 0
  %131 = vmatprep.subr.bf16.mxu0 0
  %132 = vmatpush1.bf16.msra.mxu0 %v116
  %133 = vmatprep.subr.bf16.mxu0 0
  %134 = vmatpush1.bf16.msra.mxu0 %v115
  %135 = vmatprep.subr.bf16.mxu0 0
  %136 = vmatpush2.bf16.msra.mxu0 0
  %137 = vmatprep.subr.bf16.mxu0 0
  %138 = vmatpush2.bf16.msra.mxu0 0
  %139 = vmatprep.subr.bf16.mxu0 0
  %140 = vmatpush2.bf16.msra.mxu0 0
  %141 = vmatprep.subr.bf16.mxu0 0
  %142 = vmatpush2.bf16.msra.mxu0 0
  %143 = vmatprep.subr.bf16.mxu0 0
  %144 = vmatpush2.bf16.msra.mxu0 0
  %145 = vmatprep.subr.bf16.mxu0 0
  %146 = vmatpush2.bf16.msra.mxu0 0
  %147 = vmatprep.subr.bf16.mxu0 0
  %148 = vmatpush2.bf16.msra.mxu0 0
  %149 = vmatprep.subr.bf16.mxu0 0
  %150 = vmatpush2.bf16.msra.mxu0 0
  %151 = vmatprep.mubr.bf16.mxu0 0
  %152 = vmatmul.mubr.bf16.gmra.mxu0 %v37
  %v153 = vpop.f32.mrf.mxu0
  %v154 = vadd.f32 0.0, %v153
  %v155 = vpop.f32.mrf.mxu0
  %v156 = vpop.f32.mrf.mxu0
  %v157 = vadd.f32 0.0, %v156
  %v158 = vpop.f32.mrf.mxu0
  %159 = vdwg.mxu0
  %v160 = vmul.f32 %v154, 10.0
  %v161 = vmul.f32 %v157, 10.0
  %v162 = vmax.f32 %v80, %v160
  %v163 = vmax.f32 %v81, %v161
  %v164 = vsub.f32 %v80, %v162
  %v165 = vsub.f32 %v81, %v163
  %v166 = vmul.f32 %v164, 1.442695
  %v167 = vpow.pop %v166
  %v168 = vmul.f32 %v165, 1.442695
  %v169 = vpow.pop %v168
  %v170 = vsub.f32 %v160, %v162
  %v171 = vsub.f32 %v161, %v163
  %v172 = vmul.f32 %v170, 1.442695
  %v173 = vpow.pop %v172
  %v174 = vmul.f32 %v171, 1.442695
  %v175 = vpow.pop %v174
  %v176 = vmul.f32 %v167, %v96
  %v177 = vmul.f32 %v169, %v97
  %v178 = vadd.f32 %v176, %v173
  %v179 = vadd.f32 %v177, %v175
  %v180 = vmul.f32 %v167, %v100
  %v181 = vmul.f32 %v169, %v101
  %v182 = vmul.f32 %v154, %v173
  %v183 = vmul.f32 %v157, %v175
  %v184 = vadd.f32 %v180, %v182
  %v185 = vadd.f32 %v181, %v183
  %s186 = scalar_lea.vmem %s1, 32
  %v187 = vld [vmem:[%s186] sm:$0xf]
  %v188 = vld [vmem:[%s186 + $0x4] sm:$0xf]
  %v189 = vld [vmem:[%s186 + $0x8] sm:$0xf]
  %v190 = vld [vmem:[%s186 + $0xc] sm:$0xf]
  %v195 = vunpack.c.l.b16 %v187
  %v196 = vunpack.c.l.b16 %v188
  %v197 = vunpack.c.l.b16 %v189
  %v198 = vunpack.c.l.b16 %v190
  %v199 = vpack.c.b16 %v196, %v195
  %v200 = vpack.c.b16 %v198, %v197
  %203 = vmatprep.subr.bf16.mxu0 0
  %204 = vmatpush1.bf16.msra.mxu0 0
  %205 = vmatprep.subr.bf16.mxu0 0
  %206 = vmatpush1.bf16.msra.mxu0 0
  %207 = vmatprep.subr.bf16.mxu0 0
  %208 = vmatpush1.bf16.msra.mxu0 0
  %209 = vmatprep.subr.bf16.mxu0 0
  %210 = vmatpush1.bf16.msra.mxu0 0
  %211 = vmatprep.subr.bf16.mxu0 0
  %212 = vmatpush1.bf16.msra.mxu0 0
  %213 = vmatprep.subr.bf16.mxu0 0
  %214 = vmatpush1.bf16.msra.mxu0 0
  %215 = vmatprep.subr.bf16.mxu0 0
  %216 = vmatpush1.bf16.msra.mxu0 %v200
  %217 = vmatprep.subr.bf16.mxu0 0
  %218 = vmatpush1.bf16.msra.mxu0 %v199
  %219 = vmatprep.subr.bf16.mxu0 0
  %220 = vmatpush2.bf16.msra.mxu0 0
  %221 = vmatprep.subr.bf16.mxu0 0
  %222 = vmatpush2.bf16.msra.mxu0 0
  %223 = vmatprep.subr.bf16.mxu0 0
  %224 = vmatpush2.bf16.msra.mxu0 0
  %225 = vmatprep.subr.bf16.mxu0 0
  %226 = vmatpush2.bf16.msra.mxu0 0
  %227 = vmatprep.subr.bf16.mxu0 0
  %228 = vmatpush2.bf16.msra.mxu0 0
  %229 = vmatprep.subr.bf16.mxu0 0
  %230 = vmatpush2.bf16.msra.mxu0 0
  %231 = vmatprep.subr.bf16.mxu0 0
  %232 = vmatpush2.bf16.msra.mxu0 0
  %233 = vmatprep.subr.bf16.mxu0 0
  %234 = vmatpush2.bf16.msra.mxu0 0
  %235 = vmatprep.mubr.bf16.mxu0 0
  %236 = vmatmul.mubr.bf16.gmra.mxu0 %v37
  %v237 = vpop.f32.mrf.mxu0
  %v238 = vadd.f32 0.0, %v237
  %v239 = vpop.f32.mrf.mxu0
  %v240 = vpop.f32.mrf.mxu0
  %v241 = vadd.f32 0.0, %v240
  %v242 = vpop.f32.mrf.mxu0
  %243 = vdwg.mxu0
  %v244 = vmul.f32 %v238, 10.0
  %v245 = vmul.f32 %v241, 10.0
  %v246 = vmax.f32 %v162, %v244
  %v247 = vmax.f32 %v163, %v245
  %v248 = vsub.f32 %v162, %v246
  %v249 = vsub.f32 %v163, %v247
  %v250 = vmul.f32 %v248, 1.442695
  %v251 = vpow.pop %v250
  %v252 = vmul.f32 %v249, 1.442695
  %v253 = vpow.pop %v252
  %v254 = vsub.f32 %v244, %v246
  %v255 = vsub.f32 %v245, %v247
  %v256 = vmul.f32 %v254, 1.442695
  %v257 = vpow.pop %v256
  %v258 = vmul.f32 %v255, 1.442695
  %v259 = vpow.pop %v258
  %v260 = vmul.f32 %v251, %v178
  %v261 = vmul.f32 %v253, %v179
  %v262 = vadd.f32 %v260, %v257
  %v263 = vadd.f32 %v261, %v259
  %v264 = vmul.f32 %v251, %v184
  %v265 = vmul.f32 %v253, %v185
  %v266 = vmul.f32 %v238, %v257
  %v267 = vmul.f32 %v241, %v259
  %v268 = vadd.f32 %v264, %v266
  %v269 = vadd.f32 %v265, %v267
  %s270 = scalar_lea.vmem %s1, 48
  %v271 = vld [vmem:[%s270] sm:$0xf]
  %v272 = vld [vmem:[%s270 + $0x4] sm:$0xf]
  %v273 = vld [vmem:[%s270 + $0x8] sm:$0xf]
  %v274 = vld [vmem:[%s270 + $0xc] sm:$0xf]
  %v279 = vunpack.c.l.b16 %v271
  %v280 = vunpack.c.l.b16 %v272
  %v281 = vunpack.c.l.b16 %v273
  %v282 = vunpack.c.l.b16 %v274
  %v283 = vpack.c.b16 %v280, %v279
  %v284 = vpack.c.b16 %v282, %v281
  %287 = vmatprep.subr.bf16.mxu0 0
  %288 = vmatpush1.bf16.msra.mxu0 0
  %289 = vmatprep.subr.bf16.mxu0 0
  %290 = vmatpush1.bf16.msra.mxu0 0
  %291 = vmatprep.subr.bf16.mxu0 0
  %292 = vmatpush1.bf16.msra.mxu0 0
  %293 = vmatprep.subr.bf16.mxu0 0
  %294 = vmatpush1.bf16.msra.mxu0 0
  %295 = vmatprep.subr.bf16.mxu0 0
  %296 = vmatpush1.bf16.msra.mxu0 0
  %297 = vmatprep.subr.bf16.mxu0 0
  %298 = vmatpush1.bf16.msra.mxu0 0
  %299 = vmatprep.subr.bf16.mxu0 0
  %300 = vmatpush1.bf16.msra.mxu0 %v284
  %301 = vmatprep.subr.bf16.mxu0 0
  %302 = vmatpush1.bf16.msra.mxu0 %v283
  %303 = vmatprep.subr.bf16.mxu0 0
  %304 = vmatpush2.bf16.msra.mxu0 0
  %305 = vmatprep.subr.bf16.mxu0 0
  %306 = vmatpush2.bf16.msra.mxu0 0
  %307 = vmatprep.subr.bf16.mxu0 0
  %308 = vmatpush2.bf16.msra.mxu0 0
  %309 = vmatprep.subr.bf16.mxu0 0
  %310 = vmatpush2.bf16.msra.mxu0 0
  %311 = vmatprep.subr.bf16.mxu0 0
  %312 = vmatpush2.bf16.msra.mxu0 0
  %313 = vmatprep.subr.bf16.mxu0 0
  %314 = vmatpush2.bf16.msra.mxu0 0
  %315 = vmatprep.subr.bf16.mxu0 0
  %316 = vmatpush2.bf16.msra.mxu0 0
  %317 = vmatprep.subr.bf16.mxu0 0
  %318 = vmatpush2.bf16.msra.mxu0 0
  %319 = vmatprep.mubr.bf16.mxu0 0
  %320 = vmatmul.mubr.bf16.gmra.mxu0 %v37
  %v321 = vpop.f32.mrf.mxu0
  %v322 = vadd.f32 0.0, %v321
  %v323 = vpop.f32.mrf.mxu0
  %v324 = vpop.f32.mrf.mxu0
  %v325 = vadd.f32 0.0, %v324
  %v326 = vpop.f32.mrf.mxu0
  %327 = vdwg.mxu0
  %v328 = vmul.f32 %v322, 10.0
  %v329 = vmul.f32 %v325, 10.0
  %v330 = vmax.f32 %v246, %v328
  %v331 = vmax.f32 %v247, %v329
  %v332 = vsub.f32 %v246, %v330
  %v333 = vsub.f32 %v247, %v331
  %v334 = vmul.f32 %v332, 1.442695
  %v335 = vpow.pop %v334
  %v336 = vmul.f32 %v333, 1.442695
  %v337 = vpow.pop %v336
  %v338 = vsub.f32 %v328, %v330
  %v339 = vsub.f32 %v329, %v331
  %v340 = vmul.f32 %v338, 1.442695
  %v341 = vpow.pop %v340
  %v342 = vmul.f32 %v339, 1.442695
  %v343 = vpow.pop %v342
  %v344 = vmul.f32 %v335, %v262
  %v345 = vmul.f32 %v337, %v263
  %v346 = vadd.f32 %v344, %v341
  %v347 = vadd.f32 %v345, %v343
  %v348 = vmul.f32 %v335, %v268
  %v349 = vmul.f32 %v337, %v269
  %v350 = vmul.f32 %v322, %v341
  %v351 = vmul.f32 %v325, %v343
  %v352 = vadd.f32 %v348, %v350
  %v353 = vadd.f32 %v349, %v351
  %s354 = scalar_lea.vmem %s1, 64
  %v355 = vld [vmem:[%s354] sm:$0xf]
  %v356 = vld [vmem:[%s354 + $0x4] sm:$0xf]
  %v357 = vld [vmem:[%s354 + $0x8] sm:$0xf]
  %v358 = vld [vmem:[%s354 + $0xc] sm:$0xf]
  %v363 = vunpack.c.l.b16 %v355
  %v364 = vunpack.c.l.b16 %v356
  %v365 = vunpack.c.l.b16 %v357
  %v366 = vunpack.c.l.b16 %v358
  %v367 = vpack.c.b16 %v364, %v363
  %v368 = vpack.c.b16 %v366, %v365
  %371 = vmatprep.subr.bf16.mxu0 0
  %372 = vmatpush1.bf16.msra.mxu0 0
  %373 = vmatprep.subr.bf16.mxu0 0
  %374 = vmatpush1.bf16.msra.mxu0 0
  %375 = vmatprep.subr.bf16.mxu0 0
  %376 = vmatpush1.bf16.msra.mxu0 0
  %377 = vmatprep.subr.bf16.mxu0 0
  %378 = vmatpush1.bf16.msra.mxu0 0
  %379 = vmatprep.subr.bf16.mxu0 0
  %380 = vmatpush1.bf16.msra.mxu0 0
  %381 = vmatprep.subr.bf16.mxu0 0
  %382 = vmatpush1.bf16.msra.mxu0 0
  %383 = vmatprep.subr.bf16.mxu0 0
  %384 = vmatpush1.bf16.msra.mxu0 %v368
  %385 = vmatprep.subr.bf16.mxu0 0
  %386 = vmatpush1.bf16.msra.mxu0 %v367
  %387 = vmatprep.subr.bf16.mxu0 0
  %388 = vmatpush2.bf16.msra.mxu0 0
  %389 = vmatprep.subr.bf16.mxu0 0
  %390 = vmatpush2.bf16.msra.mxu0 0
  %391 = vmatprep.subr.bf16.mxu0 0
  %392 = vmatpush2.bf16.msra.mxu0 0
  %393 = vmatprep.subr.bf16.mxu0 0
  %394 = vmatpush2.bf16.msra.mxu0 0
  %395 = vmatprep.subr.bf16.mxu0 0
  %396 = vmatpush2.bf16.msra.mxu0 0
  %397 = vmatprep.subr.bf16.mxu0 0
  %398 = vmatpush2.bf16.msra.mxu0 0
  %399 = vmatprep.subr.bf16.mxu0 0
  %400 = vmatpush2.bf16.msra.mxu0 0
  %401 = vmatprep.subr.bf16.mxu0 0
  %402 = vmatpush2.bf16.msra.mxu0 0
  %403 = vmatprep.mubr.bf16.mxu0 0
  %404 = vmatmul.mubr.bf16.gmra.mxu0 %v37
  %v405 = vpop.f32.mrf.mxu0
  %v406 = vadd.f32 0.0, %v405
  %v407 = vpop.f32.mrf.mxu0
  %v408 = vpop.f32.mrf.mxu0
  %v409 = vadd.f32 0.0, %v408
  %v410 = vpop.f32.mrf.mxu0
  %411 = vdwg.mxu0
  %v412 = vmul.f32 %v406, 10.0
  %v413 = vmul.f32 %v409, 10.0
  %v414 = vmax.f32 %v330, %v412
  %v415 = vmax.f32 %v331, %v413
  %v416 = vsub.f32 %v330, %v414
  %v417 = vsub.f32 %v331, %v415
  %v418 = vmul.f32 %v416, 1.442695
  %v419 = vpow.pop %v418
  %v420 = vmul.f32 %v417, 1.442695
  %v421 = vpow.pop %v420
  %v422 = vsub.f32 %v412, %v414
  %v423 = vsub.f32 %v413, %v415
  %v424 = vmul.f32 %v422, 1.442695
  %v425 = vpow.pop %v424
  %v426 = vmul.f32 %v423, 1.442695
  %v427 = vpow.pop %v426
  %v428 = vmul.f32 %v419, %v346
  %v429 = vmul.f32 %v421, %v347
  %v430 = vadd.f32 %v428, %v425
  %v431 = vadd.f32 %v429, %v427
  %v432 = vmul.f32 %v419, %v352
  %v433 = vmul.f32 %v421, %v353
  %v434 = vmul.f32 %v406, %v425
  %v435 = vmul.f32 %v409, %v427
  %v436 = vadd.f32 %v432, %v434
  %v437 = vadd.f32 %v433, %v435
  %s438 = scalar_lea.vmem %s1, 80
  %v439 = vld [vmem:[%s438] sm:$0xf]
  %v440 = vld [vmem:[%s438 + $0x4] sm:$0xf]
  %v441 = vld [vmem:[%s438 + $0x8] sm:$0xf]
  %v442 = vld [vmem:[%s438 + $0xc] sm:$0xf]
  %v447 = vunpack.c.l.b16 %v439
  %v448 = vunpack.c.l.b16 %v440
  %v449 = vunpack.c.l.b16 %v441
  %v450 = vunpack.c.l.b16 %v442
  %v451 = vpack.c.b16 %v448, %v447
  %v452 = vpack.c.b16 %v450, %v449
  %455 = vmatprep.subr.bf16.mxu0 0
  %456 = vmatpush1.bf16.msra.mxu0 0
  %457 = vmatprep.subr.bf16.mxu0 0
  %458 = vmatpush1.bf16.msra.mxu0 0
  %459 = vmatprep.subr.bf16.mxu0 0
  %460 = vmatpush1.bf16.msra.mxu0 0
  %461 = vmatprep.subr.bf16.mxu0 0
  %462 = vmatpush1.bf16.msra.mxu0 0
  %463 = vmatprep.subr.bf16.mxu0 0
  %464 = vmatpush1.bf16.msra.mxu0 0
  %465 = vmatprep.subr.bf16.mxu0 0
  %466 = vmatpush1.bf16.msra.mxu0 0
  %467 = vmatprep.subr.bf16.mxu0 0
  %468 = vmatpush1.bf16.msra.mxu0 %v452
  %469 = vmatprep.subr.bf16.mxu0 0
  %470 = vmatpush1.bf16.msra.mxu0 %v451
  %471 = vmatprep.subr.bf16.mxu0 0
  %472 = vmatpush2.bf16.msra.mxu0 0
  %473 = vmatprep.subr.bf16.mxu0 0
  %474 = vmatpush2.bf16.msra.mxu0 0
  %475 = vmatprep.subr.bf16.mxu0 0
  %476 = vmatpush2.bf16.msra.mxu0 0
  %477 = vmatprep.subr.bf16.mxu0 0
  %478 = vmatpush2.bf16.msra.mxu0 0
  %479 = vmatprep.subr.bf16.mxu0 0
  %480 = vmatpush2.bf16.msra.mxu0 0
  %481 = vmatprep.subr.bf16.mxu0 0
  %482 = vmatpush2.bf16.msra.mxu0 0
  %483 = vmatprep.subr.bf16.mxu0 0
  %484 = vmatpush2.bf16.msra.mxu0 0
  %485 = vmatprep.subr.bf16.mxu0 0
  %486 = vmatpush2.bf16.msra.mxu0 0
  %487 = vmatprep.mubr.bf16.mxu0 0
  %488 = vmatmul.mubr.bf16.gmra.mxu0 %v37
  %v489 = vpop.f32.mrf.mxu0
  %v490 = vadd.f32 0.0, %v489
  %v491 = vpop.f32.mrf.mxu0
  %v492 = vpop.f32.mrf.mxu0
  %v493 = vadd.f32 0.0, %v492
  %v494 = vpop.f32.mrf.mxu0
  %495 = vdwg.mxu0
  %v496 = vmul.f32 %v490, 10.0
  %v497 = vmul.f32 %v493, 10.0
  %v498 = vmax.f32 %v414, %v496
  %v499 = vmax.f32 %v415, %v497
  %v500 = vsub.f32 %v414, %v498
  %v501 = vsub.f32 %v415, %v499
  %v502 = vmul.f32 %v500, 1.442695
  %v503 = vpow.pop %v502
  %v504 = vmul.f32 %v501, 1.442695
  %v505 = vpow.pop %v504
  %v506 = vsub.f32 %v496, %v498
  %v507 = vsub.f32 %v497, %v499
  %v508 = vmul.f32 %v506, 1.442695
  %v509 = vpow.pop %v508
  %v510 = vmul.f32 %v507, 1.442695
  %v511 = vpow.pop %v510
  %v512 = vmul.f32 %v503, %v430
  %v513 = vmul.f32 %v505, %v431
  %v514 = vadd.f32 %v512, %v509
  %v515 = vadd.f32 %v513, %v511
  %v516 = vmul.f32 %v503, %v436
  %v517 = vmul.f32 %v505, %v437
  %v518 = vmul.f32 %v490, %v509
  %v519 = vmul.f32 %v493, %v511
  %v520 = vadd.f32 %v516, %v518
  %v521 = vadd.f32 %v517, %v519
  %s522 = scalar_lea.vmem %s1, 96
  %v523 = vld [vmem:[%s522] sm:$0xf]
  %v524 = vld [vmem:[%s522 + $0x4] sm:$0xf]
  %v525 = vld [vmem:[%s522 + $0x8] sm:$0xf]
  %v526 = vld [vmem:[%s522 + $0xc] sm:$0xf]
  %v531 = vunpack.c.l.b16 %v523
  %v532 = vunpack.c.l.b16 %v524
  %v533 = vunpack.c.l.b16 %v525
  %v534 = vunpack.c.l.b16 %v526
  %v535 = vpack.c.b16 %v532, %v531
  %v536 = vpack.c.b16 %v534, %v533
  %539 = vmatprep.subr.bf16.mxu0 0
  %540 = vmatpush1.bf16.msra.mxu0 0
  %541 = vmatprep.subr.bf16.mxu0 0
  %542 = vmatpush1.bf16.msra.mxu0 0
  %543 = vmatprep.subr.bf16.mxu0 0
  %544 = vmatpush1.bf16.msra.mxu0 0
  %545 = vmatprep.subr.bf16.mxu0 0
  %546 = vmatpush1.bf16.msra.mxu0 0
  %547 = vmatprep.subr.bf16.mxu0 0
  %548 = vmatpush1.bf16.msra.mxu0 0
  %549 = vmatprep.subr.bf16.mxu0 0
  %550 = vmatpush1.bf16.msra.mxu0 0
  %551 = vmatprep.subr.bf16.mxu0 0
  %552 = vmatpush1.bf16.msra.mxu0 %v536
  %553 = vmatprep.subr.bf16.mxu0 0
  %554 = vmatpush1.bf16.msra.mxu0 %v535
  %555 = vmatprep.subr.bf16.mxu0 0
  %556 = vmatpush2.bf16.msra.mxu0 0
  %557 = vmatprep.subr.bf16.mxu0 0
  %558 = vmatpush2.bf16.msra.mxu0 0
  %559 = vmatprep.subr.bf16.mxu0 0
  %560 = vmatpush2.bf16.msra.mxu0 0
  %561 = vmatprep.subr.bf16.mxu0 0
  %562 = vmatpush2.bf16.msra.mxu0 0
  %563 = vmatprep.subr.bf16.mxu0 0
  %564 = vmatpush2.bf16.msra.mxu0 0
  %565 = vmatprep.subr.bf16.mxu0 0
  %566 = vmatpush2.bf16.msra.mxu0 0
  %567 = vmatprep.subr.bf16.mxu0 0
  %568 = vmatpush2.bf16.msra.mxu0 0
  %569 = vmatprep.subr.bf16.mxu0 0
  %570 = vmatpush2.bf16.msra.mxu0 0
  %571 = vmatprep.mubr.bf16.mxu0 0
  %572 = vmatmul.mubr.bf16.gmra.mxu0 %v37
  %v573 = vpop.f32.mrf.mxu0
  %v574 = vadd.f32 0.0, %v573
  %v575 = vpop.f32.mrf.mxu0
  %v576 = vpop.f32.mrf.mxu0
  %v577 = vadd.f32 0.0, %v576
  %v578 = vpop.f32.mrf.mxu0
  %579 = vdwg.mxu0
  %v580 = vmul.f32 %v574, 10.0
  %v581 = vmul.f32 %v577, 10.0
  %v582 = vmax.f32 %v498, %v580
  %v583 = vmax.f32 %v499, %v581
  %v584 = vsub.f32 %v498, %v582
  %v585 = vsub.f32 %v499, %v583
  %v586 = vmul.f32 %v584, 1.442695
  %v587 = vpow.pop %v586
  %v588 = vmul.f32 %v585, 1.442695
  %v589 = vpow.pop %v588
  %v590 = vsub.f32 %v580, %v582
  %v591 = vsub.f32 %v581, %v583
  %v592 = vmul.f32 %v590, 1.442695
  %v593 = vpow.pop %v592
  %v594 = vmul.f32 %v591, 1.442695
  %v595 = vpow.pop %v594
  %v596 = vmul.f32 %v587, %v514
  %v597 = vmul.f32 %v589, %v515
  %v598 = vadd.f32 %v596, %v593
  %v599 = vadd.f32 %v597, %v595
  %v600 = vmul.f32 %v587, %v520
  %v601 = vmul.f32 %v589, %v521
  %v602 = vmul.f32 %v574, %v593
  %v603 = vmul.f32 %v577, %v595
  %v604 = vadd.f32 %v600, %v602
  %v605 = vadd.f32 %v601, %v603
  %s606 = scalar_lea.vmem %s1, 112
  %v607 = vld [vmem:[%s606] sm:$0xf]
  %v608 = vld [vmem:[%s606 + $0x4] sm:$0xf]
  %v609 = vld [vmem:[%s606 + $0x8] sm:$0xf]
  %v610 = vld [vmem:[%s606 + $0xc] sm:$0xf]
  %v615 = vunpack.c.l.b16 %v607
  %v616 = vunpack.c.l.b16 %v608
  %v617 = vunpack.c.l.b16 %v609
  %v618 = vunpack.c.l.b16 %v610
  %v619 = vpack.c.b16 %v616, %v615
  %v620 = vpack.c.b16 %v618, %v617
  %623 = vmatprep.subr.bf16.mxu0 0
  %624 = vmatpush1.bf16.msra.mxu0 0
  %625 = vmatprep.subr.bf16.mxu0 0
  %626 = vmatpush1.bf16.msra.mxu0 0
  %627 = vmatprep.subr.bf16.mxu0 0
  %628 = vmatpush1.bf16.msra.mxu0 0
  %629 = vmatprep.subr.bf16.mxu0 0
  %630 = vmatpush1.bf16.msra.mxu0 0
  %631 = vmatprep.subr.bf16.mxu0 0
  %632 = vmatpush1.bf16.msra.mxu0 0
  %633 = vmatprep.subr.bf16.mxu0 0
  %634 = vmatpush1.bf16.msra.mxu0 0
  %635 = vmatprep.subr.bf16.mxu0 0
  %636 = vmatpush1.bf16.msra.mxu0 %v620
  %637 = vmatprep.subr.bf16.mxu0 0
  %638 = vmatpush1.bf16.msra.mxu0 %v619
  %639 = vmatprep.subr.bf16.mxu0 0
  %640 = vmatpush2.bf16.msra.mxu0 0
  %641 = vmatprep.subr.bf16.mxu0 0
  %642 = vmatpush2.bf16.msra.mxu0 0
  %643 = vmatprep.subr.bf16.mxu0 0
  %644 = vmatpush2.bf16.msra.mxu0 0
  %645 = vmatprep.subr.bf16.mxu0 0
  %646 = vmatpush2.bf16.msra.mxu0 0
  %647 = vmatprep.subr.bf16.mxu0 0
  %648 = vmatpush2.bf16.msra.mxu0 0
  %649 = vmatprep.subr.bf16.mxu0 0
  %650 = vmatpush2.bf16.msra.mxu0 0
  %651 = vmatprep.subr.bf16.mxu0 0
  %652 = vmatpush2.bf16.msra.mxu0 0
  %653 = vmatprep.subr.bf16.mxu0 0
  %654 = vmatpush2.bf16.msra.mxu0 0
  %655 = vmatprep.mubr.bf16.mxu0 0
  %656 = vmatmul.mubr.bf16.gmra.mxu0 %v37
  %v657 = vpop.f32.mrf.mxu0
  %v658 = vadd.f32 0.0, %v657
  %v659 = vpop.f32.mrf.mxu0
  %v660 = vpop.f32.mrf.mxu0
  %v661 = vadd.f32 0.0, %v660
  %v662 = vpop.f32.mrf.mxu0
  %663 = vdwg.mxu0
  %v664 = vmul.f32 %v658, 10.0
  %v665 = vmul.f32 %v661, 10.0
  %v666 = vmax.f32 %v582, %v664
  %v667 = vmax.f32 %v583, %v665
  %v668 = vsub.f32 %v582, %v666
  %v669 = vsub.f32 %v583, %v667
  %v670 = vmul.f32 %v668, 1.442695
  %v671 = vpow.pop %v670
  %v672 = vmul.f32 %v669, 1.442695
  %v673 = vpow.pop %v672
  %v674 = vsub.f32 %v664, %v666
  %v675 = vsub.f32 %v665, %v667
  %v676 = vmul.f32 %v674, 1.442695
  %v677 = vpow.pop %v676
  %v678 = vmul.f32 %v675, 1.442695
  %v679 = vpow.pop %v678
  %v680 = vmul.f32 %v671, %v598
  %v681 = vmul.f32 %v673, %v599
  %v682 = vadd.f32 %v680, %v677
  %v683 = vadd.f32 %v681, %v679
  %v684 = vmul.f32 %v671, %v604
  %v685 = vmul.f32 %v673, %v605
  %v686 = vmul.f32 %v658, %v677
  %v687 = vmul.f32 %v661, %v679
  %v688 = vadd.f32 %v684, %v686
  %v689 = vadd.f32 %v685, %v687
  %s690 = scalar_lea.vmem %s1, 128
  %v691 = vld [vmem:[%s690] sm:$0xf]
  %v692 = vld [vmem:[%s690 + $0x4] sm:$0xf]
  %v693 = vld [vmem:[%s690 + $0x8] sm:$0xf]
  %v694 = vld [vmem:[%s690 + $0xc] sm:$0xf]
  %v699 = vunpack.c.l.b16 %v691
  %v700 = vunpack.c.l.b16 %v692
  %v701 = vunpack.c.l.b16 %v693
  %v702 = vunpack.c.l.b16 %v694
  %v703 = vpack.c.b16 %v700, %v699
  %v704 = vpack.c.b16 %v702, %v701
  %707 = vmatprep.subr.bf16.mxu0 0
  %708 = vmatpush1.bf16.msra.mxu0 0
  %709 = vmatprep.subr.bf16.mxu0 0
  %710 = vmatpush1.bf16.msra.mxu0 0
  %711 = vmatprep.subr.bf16.mxu0 0
  %712 = vmatpush1.bf16.msra.mxu0 0
  %713 = vmatprep.subr.bf16.mxu0 0
  %714 = vmatpush1.bf16.msra.mxu0 0
  %715 = vmatprep.subr.bf16.mxu0 0
  %716 = vmatpush1.bf16.msra.mxu0 0
  %717 = vmatprep.subr.bf16.mxu0 0
  %718 = vmatpush1.bf16.msra.mxu0 0
  %719 = vmatprep.subr.bf16.mxu0 0
  %720 = vmatpush1.bf16.msra.mxu0 %v704
  %721 = vmatprep.subr.bf16.mxu0 0
  %722 = vmatpush1.bf16.msra.mxu0 %v703
  %723 = vmatprep.subr.bf16.mxu0 0
  %724 = vmatpush2.bf16.msra.mxu0 0
  %725 = vmatprep.subr.bf16.mxu0 0
  %726 = vmatpush2.bf16.msra.mxu0 0
  %727 = vmatprep.subr.bf16.mxu0 0
  %728 = vmatpush2.bf16.msra.mxu0 0
  %729 = vmatprep.subr.bf16.mxu0 0
  %730 = vmatpush2.bf16.msra.mxu0 0
  %731 = vmatprep.subr.bf16.mxu0 0
  %732 = vmatpush2.bf16.msra.mxu0 0
  %733 = vmatprep.subr.bf16.mxu0 0
  %734 = vmatpush2.bf16.msra.mxu0 0
  %735 = vmatprep.subr.bf16.mxu0 0
  %736 = vmatpush2.bf16.msra.mxu0 0
  %737 = vmatprep.subr.bf16.mxu0 0
  %738 = vmatpush2.bf16.msra.mxu0 0
  %739 = vmatprep.mubr.bf16.mxu0 0
  %740 = vmatmul.mubr.bf16.gmra.mxu0 %v37
  %v741 = vpop.f32.mrf.mxu0
  %v742 = vadd.f32 0.0, %v741
  %v743 = vpop.f32.mrf.mxu0
  %v744 = vpop.f32.mrf.mxu0
  %v745 = vadd.f32 0.0, %v744
  %v746 = vpop.f32.mrf.mxu0
  %747 = vdwg.mxu0
  %v748 = vmul.f32 %v742, 10.0
  %v749 = vmul.f32 %v745, 10.0
  %v750 = vmax.f32 %v666, %v748
  %v751 = vmax.f32 %v667, %v749
  %v752 = vsub.f32 %v666, %v750
  %v753 = vsub.f32 %v667, %v751
  %v754 = vmul.f32 %v752, 1.442695
  %v755 = vpow.pop %v754
  %v756 = vmul.f32 %v753, 1.442695
  %v757 = vpow.pop %v756
  %v758 = vsub.f32 %v748, %v750
  %v759 = vsub.f32 %v749, %v751
  %v760 = vmul.f32 %v758, 1.442695
  %v761 = vpow.pop %v760
  %v762 = vmul.f32 %v759, 1.442695
  %v763 = vpow.pop %v762
  %v764 = vmul.f32 %v755, %v682
  %v765 = vmul.f32 %v757, %v683
  %v766 = vadd.f32 %v764, %v761
  %v767 = vadd.f32 %v765, %v763
  %v768 = vmul.f32 %v755, %v688
  %v769 = vmul.f32 %v757, %v689
  %v770 = vmul.f32 %v742, %v761
  %v771 = vmul.f32 %v745, %v763
  %v772 = vadd.f32 %v768, %v770
  %v773 = vadd.f32 %v769, %v771
  %s774 = scalar_lea.vmem %s1, 144
  %v775 = vld [vmem:[%s774] sm:$0xf]
  %v776 = vld [vmem:[%s774 + $0x4] sm:$0xf]
  %v777 = vld [vmem:[%s774 + $0x8] sm:$0xf]
  %v778 = vld [vmem:[%s774 + $0xc] sm:$0xf]
  %v783 = vunpack.c.l.b16 %v775
  %v784 = vunpack.c.l.b16 %v776
  %v785 = vunpack.c.l.b16 %v777
  %v786 = vunpack.c.l.b16 %v778
  %v787 = vpack.c.b16 %v784, %v783
  %v788 = vpack.c.b16 %v786, %v785
  %791 = vmatprep.subr.bf16.mxu0 0
  %792 = vmatpush1.bf16.msra.mxu0 0
  %793 = vmatprep.subr.bf16.mxu0 0
  %794 = vmatpush1.bf16.msra.mxu0 0
  %795 = vmatprep.subr.bf16.mxu0 0
  %796 = vmatpush1.bf16.msra.mxu0 0
  %797 = vmatprep.subr.bf16.mxu0 0
  %798 = vmatpush1.bf16.msra.mxu0 0
  %799 = vmatprep.subr.bf16.mxu0 0
  %800 = vmatpush1.bf16.msra.mxu0 0
  %801 = vmatprep.subr.bf16.mxu0 0
  %802 = vmatpush1.bf16.msra.mxu0 0
  %803 = vmatprep.subr.bf16.mxu0 0
  %804 = vmatpush1.bf16.msra.mxu0 %v788
  %805 = vmatprep.subr.bf16.mxu0 0
  %806 = vmatpush1.bf16.msra.mxu0 %v787
  %807 = vmatprep.subr.bf16.mxu0 0
  %808 = vmatpush2.bf16.msra.mxu0 0
  %809 = vmatprep.subr.bf16.mxu0 0
  %810 = vmatpush2.bf16.msra.mxu0 0
  %811 = vmatprep.subr.bf16.mxu0 0
  %812 = vmatpush2.bf16.msra.mxu0 0
  %813 = vmatprep.subr.bf16.mxu0 0
  %814 = vmatpush2.bf16.msra.mxu0 0
  %815 = vmatprep.subr.bf16.mxu0 0
  %816 = vmatpush2.bf16.msra.mxu0 0
  %817 = vmatprep.subr.bf16.mxu0 0
  %818 = vmatpush2.bf16.msra.mxu0 0
  %819 = vmatprep.subr.bf16.mxu0 0
  %820 = vmatpush2.bf16.msra.mxu0 0
  %821 = vmatprep.subr.bf16.mxu0 0
  %822 = vmatpush2.bf16.msra.mxu0 0
  %823 = vmatprep.mubr.bf16.mxu0 0
  %824 = vmatmul.mubr.bf16.gmra.mxu0 %v37
  %v825 = vpop.f32.mrf.mxu0
  %v826 = vadd.f32 0.0, %v825
  %v827 = vpop.f32.mrf.mxu0
  %v828 = vpop.f32.mrf.mxu0
  %v829 = vadd.f32 0.0, %v828
  %v830 = vpop.f32.mrf.mxu0
  %831 = vdwg.mxu0
  %v832 = vmul.f32 %v826, 10.0
  %v833 = vmul.f32 %v829, 10.0
  %v834 = vmax.f32 %v750, %v832
  %v835 = vmax.f32 %v751, %v833
  %v836 = vsub.f32 %v750, %v834
  %v837 = vsub.f32 %v751, %v835
  %v838 = vmul.f32 %v836, 1.442695
  %v839 = vpow.pop %v838
  %v840 = vmul.f32 %v837, 1.442695
  %v841 = vpow.pop %v840
  %v842 = vsub.f32 %v832, %v834
  %v843 = vsub.f32 %v833, %v835
  %v844 = vmul.f32 %v842, 1.442695
  %v845 = vpow.pop %v844
  %v846 = vmul.f32 %v843, 1.442695
  %v847 = vpow.pop %v846
  %v848 = vmul.f32 %v839, %v766
  %v849 = vmul.f32 %v841, %v767
  %v850 = vadd.f32 %v848, %v845
  %v851 = vadd.f32 %v849, %v847
  %v852 = vmul.f32 %v839, %v772
  %v853 = vmul.f32 %v841, %v773
  %v854 = vmul.f32 %v826, %v845
  %v855 = vmul.f32 %v829, %v847
  %v856 = vadd.f32 %v852, %v854
  %v857 = vadd.f32 %v853, %v855
  %s858 = scalar_lea.vmem %s1, 160
  %v859 = vld [vmem:[%s858] sm:$0xf]
  %v860 = vld [vmem:[%s858 + $0x4] sm:$0xf]
  %v861 = vld [vmem:[%s858 + $0x8] sm:$0xf]
  %v862 = vld [vmem:[%s858 + $0xc] sm:$0xf]
  %v867 = vunpack.c.l.b16 %v859
  %v868 = vunpack.c.l.b16 %v860
  %v869 = vunpack.c.l.b16 %v861
  %v870 = vunpack.c.l.b16 %v862
  %v871 = vpack.c.b16 %v868, %v867
  %v872 = vpack.c.b16 %v870, %v869
  %875 = vmatprep.subr.bf16.mxu0 0
  %876 = vmatpush1.bf16.msra.mxu0 0
  %877 = vmatprep.subr.bf16.mxu0 0
  %878 = vmatpush1.bf16.msra.mxu0 0
  %879 = vmatprep.subr.bf16.mxu0 0
  %880 = vmatpush1.bf16.msra.mxu0 0
  %881 = vmatprep.subr.bf16.mxu0 0
  %882 = vmatpush1.bf16.msra.mxu0 0
  %883 = vmatprep.subr.bf16.mxu0 0
  %884 = vmatpush1.bf16.msra.mxu0 0
  %885 = vmatprep.subr.bf16.mxu0 0
  %886 = vmatpush1.bf16.msra.mxu0 0
  %887 = vmatprep.subr.bf16.mxu0 0
  %888 = vmatpush1.bf16.msra.mxu0 %v872
  %889 = vmatprep.subr.bf16.mxu0 0
  %890 = vmatpush1.bf16.msra.mxu0 %v871
  %891 = vmatprep.subr.bf16.mxu0 0
  %892 = vmatpush2.bf16.msra.mxu0 0
  %893 = vmatprep.subr.bf16.mxu0 0
  %894 = vmatpush2.bf16.msra.mxu0 0
  %895 = vmatprep.subr.bf16.mxu0 0
  %896 = vmatpush2.bf16.msra.mxu0 0
  %897 = vmatprep.subr.bf16.mxu0 0
  %898 = vmatpush2.bf16.msra.mxu0 0
  %899 = vmatprep.subr.bf16.mxu0 0
  %900 = vmatpush2.bf16.msra.mxu0 0
  %901 = vmatprep.subr.bf16.mxu0 0
  %902 = vmatpush2.bf16.msra.mxu0 0
  %903 = vmatprep.subr.bf16.mxu0 0
  %904 = vmatpush2.bf16.msra.mxu0 0
  %905 = vmatprep.subr.bf16.mxu0 0
  %906 = vmatpush2.bf16.msra.mxu0 0
  %907 = vmatprep.mubr.bf16.mxu0 0
  %908 = vmatmul.mubr.bf16.gmra.mxu0 %v37
  %v909 = vpop.f32.mrf.mxu0
  %v910 = vadd.f32 0.0, %v909
  %v911 = vpop.f32.mrf.mxu0
  %v912 = vpop.f32.mrf.mxu0
  %v913 = vadd.f32 0.0, %v912
  %v914 = vpop.f32.mrf.mxu0
  %915 = vdwg.mxu0
  %v916 = vmul.f32 %v910, 10.0
  %v917 = vmul.f32 %v913, 10.0
  %v918 = vmax.f32 %v834, %v916
  %v919 = vmax.f32 %v835, %v917
  %v920 = vsub.f32 %v834, %v918
  %v921 = vsub.f32 %v835, %v919
  %v922 = vmul.f32 %v920, 1.442695
  %v923 = vpow.pop %v922
  %v924 = vmul.f32 %v921, 1.442695
  %v925 = vpow.pop %v924
  %v926 = vsub.f32 %v916, %v918
  %v927 = vsub.f32 %v917, %v919
  %v928 = vmul.f32 %v926, 1.442695
  %v929 = vpow.pop %v928
  %v930 = vmul.f32 %v927, 1.442695
  %v931 = vpow.pop %v930
  %v932 = vmul.f32 %v923, %v850
  %v933 = vmul.f32 %v925, %v851
  %v934 = vadd.f32 %v932, %v929
  %v935 = vadd.f32 %v933, %v931
  %v936 = vmul.f32 %v923, %v856
  %v937 = vmul.f32 %v925, %v857
  %v938 = vmul.f32 %v910, %v929
  %v939 = vmul.f32 %v913, %v931
  %v940 = vadd.f32 %v936, %v938
  %v941 = vadd.f32 %v937, %v939
  %s942 = scalar_lea.vmem %s1, 176
  %v943 = vld [vmem:[%s942] sm:$0xf]
  %v944 = vld [vmem:[%s942 + $0x4] sm:$0xf]
  %v945 = vld [vmem:[%s942 + $0x8] sm:$0xf]
  %v946 = vld [vmem:[%s942 + $0xc] sm:$0xf]
  %v951 = vunpack.c.l.b16 %v943
  %v952 = vunpack.c.l.b16 %v944
  %v953 = vunpack.c.l.b16 %v945
  %v954 = vunpack.c.l.b16 %v946
  %v955 = vpack.c.b16 %v952, %v951
  %v956 = vpack.c.b16 %v954, %v953
  %959 = vmatprep.subr.bf16.mxu0 0
  %960 = vmatpush1.bf16.msra.mxu0 0
  %961 = vmatprep.subr.bf16.mxu0 0
  %962 = vmatpush1.bf16.msra.mxu0 0
  %963 = vmatprep.subr.bf16.mxu0 0
  %964 = vmatpush1.bf16.msra.mxu0 0
  %965 = vmatprep.subr.bf16.mxu0 0
  %966 = vmatpush1.bf16.msra.mxu0 0
  %967 = vmatprep.subr.bf16.mxu0 0
  %968 = vmatpush1.bf16.msra.mxu0 0
  %969 = vmatprep.subr.bf16.mxu0 0
  %970 = vmatpush1.bf16.msra.mxu0 0
  %971 = vmatprep.subr.bf16.mxu0 0
  %972 = vmatpush1.bf16.msra.mxu0 %v956
  %973 = vmatprep.subr.bf16.mxu0 0
  %974 = vmatpush1.bf16.msra.mxu0 %v955
  %975 = vmatprep.subr.bf16.mxu0 0
  %976 = vmatpush2.bf16.msra.mxu0 0
  %977 = vmatprep.subr.bf16.mxu0 0
  %978 = vmatpush2.bf16.msra.mxu0 0
  %979 = vmatprep.subr.bf16.mxu0 0
  %980 = vmatpush2.bf16.msra.mxu0 0
  %981 = vmatprep.subr.bf16.mxu0 0
  %982 = vmatpush2.bf16.msra.mxu0 0
  %983 = vmatprep.subr.bf16.mxu0 0
  %984 = vmatpush2.bf16.msra.mxu0 0
  %985 = vmatprep.subr.bf16.mxu0 0
  %986 = vmatpush2.bf16.msra.mxu0 0
  %987 = vmatprep.subr.bf16.mxu0 0
  %988 = vmatpush2.bf16.msra.mxu0 0
  %989 = vmatprep.subr.bf16.mxu0 0
  %990 = vmatpush2.bf16.msra.mxu0 0
  %991 = vmatprep.mubr.bf16.mxu0 0
  %992 = vmatmul.mubr.bf16.gmra.mxu0 %v37
  %v993 = vpop.f32.mrf.mxu0
  %v994 = vadd.f32 0.0, %v993
  %v995 = vpop.f32.mrf.mxu0
  %v996 = vpop.f32.mrf.mxu0
  %v997 = vadd.f32 0.0, %v996
  %v998 = vpop.f32.mrf.mxu0
  %999 = vdwg.mxu0
  %v1000 = vmul.f32 %v994, 10.0
  %v1001 = vmul.f32 %v997, 10.0
  %v1002 = vmax.f32 %v918, %v1000
  %v1003 = vmax.f32 %v919, %v1001
  %v1004 = vsub.f32 %v918, %v1002
  %v1005 = vsub.f32 %v919, %v1003
  %v1006 = vmul.f32 %v1004, 1.442695
  %v1007 = vpow.pop %v1006
  %v1008 = vmul.f32 %v1005, 1.442695
  %v1009 = vpow.pop %v1008
  %v1010 = vsub.f32 %v1000, %v1002
  %v1011 = vsub.f32 %v1001, %v1003
  %v1012 = vmul.f32 %v1010, 1.442695
  %v1013 = vpow.pop %v1012
  %v1014 = vmul.f32 %v1011, 1.442695
  %v1015 = vpow.pop %v1014
  %v1016 = vmul.f32 %v1007, %v934
  %v1017 = vmul.f32 %v1009, %v935
  %v1018 = vadd.f32 %v1016, %v1013
  %v1019 = vadd.f32 %v1017, %v1015
  %v1020 = vmul.f32 %v1007, %v940
  %v1021 = vmul.f32 %v1009, %v941
  %v1022 = vmul.f32 %v994, %v1013
  %v1023 = vmul.f32 %v997, %v1015
  %v1024 = vadd.f32 %v1020, %v1022
  %v1025 = vadd.f32 %v1021, %v1023
  %s1026 = scalar_lea.vmem %s1, 192
  %v1027 = vld [vmem:[%s1026] sm:$0xf]
  %v1028 = vld [vmem:[%s1026 + $0x4] sm:$0xf]
  %v1029 = vld [vmem:[%s1026 + $0x8] sm:$0xf]
  %v1030 = vld [vmem:[%s1026 + $0xc] sm:$0xf]
  %v1035 = vunpack.c.l.b16 %v1027
  %v1036 = vunpack.c.l.b16 %v1028
  %v1037 = vunpack.c.l.b16 %v1029
  %v1038 = vunpack.c.l.b16 %v1030
  %v1039 = vpack.c.b16 %v1036, %v1035
  %v1040 = vpack.c.b16 %v1038, %v1037
  %1043 = vmatprep.subr.bf16.mxu0 0
  %1044 = vmatpush1.bf16.msra.mxu0 0
  %1045 = vmatprep.subr.bf16.mxu0 0
  %1046 = vmatpush1.bf16.msra.mxu0 0
  %1047 = vmatprep.subr.bf16.mxu0 0
  %1048 = vmatpush1.bf16.msra.mxu0 0
  %1049 = vmatprep.subr.bf16.mxu0 0
  %1050 = vmatpush1.bf16.msra.mxu0 0
  %1051 = vmatprep.subr.bf16.mxu0 0
  %1052 = vmatpush1.bf16.msra.mxu0 0
  %1053 = vmatprep.subr.bf16.mxu0 0
  %1054 = vmatpush1.bf16.msra.mxu0 0
  %1055 = vmatprep.subr.bf16.mxu0 0
  %1056 = vmatpush1.bf16.msra.mxu0 %v1040
  %1057 = vmatprep.subr.bf16.mxu0 0
  %1058 = vmatpush1.bf16.msra.mxu0 %v1039
  %1059 = vmatprep.subr.bf16.mxu0 0
  %1060 = vmatpush2.bf16.msra.mxu0 0
  %1061 = vmatprep.subr.bf16.mxu0 0
  %1062 = vmatpush2.bf16.msra.mxu0 0
  %1063 = vmatprep.subr.bf16.mxu0 0
  %1064 = vmatpush2.bf16.msra.mxu0 0
  %1065 = vmatprep.subr.bf16.mxu0 0
  %1066 = vmatpush2.bf16.msra.mxu0 0
  %1067 = vmatprep.subr.bf16.mxu0 0
  %1068 = vmatpush2.bf16.msra.mxu0 0
  %1069 = vmatprep.subr.bf16.mxu0 0
  %1070 = vmatpush2.bf16.msra.mxu0 0
  %1071 = vmatprep.subr.bf16.mxu0 0
  %1072 = vmatpush2.bf16.msra.mxu0 0
  %1073 = vmatprep.subr.bf16.mxu0 0
  %1074 = vmatpush2.bf16.msra.mxu0 0
  %1075 = vmatprep.mubr.bf16.mxu0 0
  %1076 = vmatmul.mubr.bf16.gmra.mxu0 %v37
  %v1077 = vpop.f32.mrf.mxu0
  %v1078 = vadd.f32 0.0, %v1077
  %v1079 = vpop.f32.mrf.mxu0
  %v1080 = vpop.f32.mrf.mxu0
  %v1081 = vadd.f32 0.0, %v1080
  %v1082 = vpop.f32.mrf.mxu0
  %1083 = vdwg.mxu0
  %v1084 = vmul.f32 %v1078, 10.0
  %v1085 = vmul.f32 %v1081, 10.0
  %v1086 = vmax.f32 %v1002, %v1084
  %v1087 = vmax.f32 %v1003, %v1085
  %v1088 = vsub.f32 %v1002, %v1086
  %v1089 = vsub.f32 %v1003, %v1087
  %v1090 = vmul.f32 %v1088, 1.442695
  %v1091 = vpow.pop %v1090
  %v1092 = vmul.f32 %v1089, 1.442695
  %v1093 = vpow.pop %v1092
  %v1094 = vsub.f32 %v1084, %v1086
  %v1095 = vsub.f32 %v1085, %v1087
  %v1096 = vmul.f32 %v1094, 1.442695
  %v1097 = vpow.pop %v1096
  %v1098 = vmul.f32 %v1095, 1.442695
  %v1099 = vpow.pop %v1098
  %v1100 = vmul.f32 %v1091, %v1018
  %v1101 = vmul.f32 %v1093, %v1019
  %v1102 = vadd.f32 %v1100, %v1097
  %v1103 = vadd.f32 %v1101, %v1099
  %v1104 = vmul.f32 %v1091, %v1024
  %v1105 = vmul.f32 %v1093, %v1025
  %v1106 = vmul.f32 %v1078, %v1097
  %v1107 = vmul.f32 %v1081, %v1099
  %v1108 = vadd.f32 %v1104, %v1106
  %v1109 = vadd.f32 %v1105, %v1107
  %s1110 = scalar_lea.vmem %s1, 208
  %v1111 = vld [vmem:[%s1110] sm:$0xf]
  %v1112 = vld [vmem:[%s1110 + $0x4] sm:$0xf]
  %v1113 = vld [vmem:[%s1110 + $0x8] sm:$0xf]
  %v1114 = vld [vmem:[%s1110 + $0xc] sm:$0xf]
  %v1119 = vunpack.c.l.b16 %v1111
  %v1120 = vunpack.c.l.b16 %v1112
  %v1121 = vunpack.c.l.b16 %v1113
  %v1122 = vunpack.c.l.b16 %v1114
  %v1123 = vpack.c.b16 %v1120, %v1119
  %v1124 = vpack.c.b16 %v1122, %v1121
  %1127 = vmatprep.subr.bf16.mxu0 0
  %1128 = vmatpush1.bf16.msra.mxu0 0
  %1129 = vmatprep.subr.bf16.mxu0 0
  %1130 = vmatpush1.bf16.msra.mxu0 0
  %1131 = vmatprep.subr.bf16.mxu0 0
  %1132 = vmatpush1.bf16.msra.mxu0 0
  %1133 = vmatprep.subr.bf16.mxu0 0
  %1134 = vmatpush1.bf16.msra.mxu0 0
  %1135 = vmatprep.subr.bf16.mxu0 0
  %1136 = vmatpush1.bf16.msra.mxu0 0
  %1137 = vmatprep.subr.bf16.mxu0 0
  %1138 = vmatpush1.bf16.msra.mxu0 0
  %1139 = vmatprep.subr.bf16.mxu0 0
  %1140 = vmatpush1.bf16.msra.mxu0 %v1124
  %1141 = vmatprep.subr.bf16.mxu0 0
  %1142 = vmatpush1.bf16.msra.mxu0 %v1123
  %1143 = vmatprep.subr.bf16.mxu0 0
  %1144 = vmatpush2.bf16.msra.mxu0 0
  %1145 = vmatprep.subr.bf16.mxu0 0
  %1146 = vmatpush2.bf16.msra.mxu0 0
  %1147 = vmatprep.subr.bf16.mxu0 0
  %1148 = vmatpush2.bf16.msra.mxu0 0
  %1149 = vmatprep.subr.bf16.mxu0 0
  %1150 = vmatpush2.bf16.msra.mxu0 0
  %1151 = vmatprep.subr.bf16.mxu0 0
  %1152 = vmatpush2.bf16.msra.mxu0 0
  %1153 = vmatprep.subr.bf16.mxu0 0
  %1154 = vmatpush2.bf16.msra.mxu0 0
  %1155 = vmatprep.subr.bf16.mxu0 0
  %1156 = vmatpush2.bf16.msra.mxu0 0
  %1157 = vmatprep.subr.bf16.mxu0 0
  %1158 = vmatpush2.bf16.msra.mxu0 0
  %1159 = vmatprep.mubr.bf16.mxu0 0
  %1160 = vmatmul.mubr.bf16.gmra.mxu0 %v37
  %v1161 = vpop.f32.mrf.mxu0
  %v1162 = vadd.f32 0.0, %v1161
  %v1163 = vpop.f32.mrf.mxu0
  %v1164 = vpop.f32.mrf.mxu0
  %v1165 = vadd.f32 0.0, %v1164
  %v1166 = vpop.f32.mrf.mxu0
  %1167 = vdwg.mxu0
  %v1168 = vmul.f32 %v1162, 10.0
  %v1169 = vmul.f32 %v1165, 10.0
  %v1170 = vmax.f32 %v1086, %v1168
  %v1171 = vmax.f32 %v1087, %v1169
  %v1172 = vsub.f32 %v1086, %v1170
  %v1173 = vsub.f32 %v1087, %v1171
  %v1174 = vmul.f32 %v1172, 1.442695
  %v1175 = vpow.pop %v1174
  %v1176 = vmul.f32 %v1173, 1.442695
  %v1177 = vpow.pop %v1176
  %v1178 = vsub.f32 %v1168, %v1170
  %v1179 = vsub.f32 %v1169, %v1171
  %v1180 = vmul.f32 %v1178, 1.442695
  %v1181 = vpow.pop %v1180
  %v1182 = vmul.f32 %v1179, 1.442695
  %v1183 = vpow.pop %v1182
  %v1184 = vmul.f32 %v1175, %v1102
  %v1185 = vmul.f32 %v1177, %v1103
  %v1186 = vadd.f32 %v1184, %v1181
  %v1187 = vadd.f32 %v1185, %v1183
  %v1188 = vmul.f32 %v1175, %v1108
  %v1189 = vmul.f32 %v1177, %v1109
  %v1190 = vmul.f32 %v1162, %v1181
  %v1191 = vmul.f32 %v1165, %v1183
  %v1192 = vadd.f32 %v1188, %v1190
  %v1193 = vadd.f32 %v1189, %v1191
  %s1194 = scalar_lea.vmem %s1, 224
  %v1195 = vld [vmem:[%s1194] sm:$0xf]
  %v1196 = vld [vmem:[%s1194 + $0x4] sm:$0xf]
  %v1197 = vld [vmem:[%s1194 + $0x8] sm:$0xf]
  %v1198 = vld [vmem:[%s1194 + $0xc] sm:$0xf]
  %v1203 = vunpack.c.l.b16 %v1195
  %v1204 = vunpack.c.l.b16 %v1196
  %v1205 = vunpack.c.l.b16 %v1197
  %v1206 = vunpack.c.l.b16 %v1198
  %v1207 = vpack.c.b16 %v1204, %v1203
  %v1208 = vpack.c.b16 %v1206, %v1205
  %1211 = vmatprep.subr.bf16.mxu0 0
  %1212 = vmatpush1.bf16.msra.mxu0 0
  %1213 = vmatprep.subr.bf16.mxu0 0
  %1214 = vmatpush1.bf16.msra.mxu0 0
  %1215 = vmatprep.subr.bf16.mxu0 0
  %1216 = vmatpush1.bf16.msra.mxu0 0
  %1217 = vmatprep.subr.bf16.mxu0 0
  %1218 = vmatpush1.bf16.msra.mxu0 0
  %1219 = vmatprep.subr.bf16.mxu0 0
  %1220 = vmatpush1.bf16.msra.mxu0 0
  %1221 = vmatprep.subr.bf16.mxu0 0
  %1222 = vmatpush1.bf16.msra.mxu0 0
  %1223 = vmatprep.subr.bf16.mxu0 0
  %1224 = vmatpush1.bf16.msra.mxu0 %v1208
  %1225 = vmatprep.subr.bf16.mxu0 0
  %1226 = vmatpush1.bf16.msra.mxu0 %v1207
  %1227 = vmatprep.subr.bf16.mxu0 0
  %1228 = vmatpush2.bf16.msra.mxu0 0
  %1229 = vmatprep.subr.bf16.mxu0 0
  %1230 = vmatpush2.bf16.msra.mxu0 0
  %1231 = vmatprep.subr.bf16.mxu0 0
  %1232 = vmatpush2.bf16.msra.mxu0 0
  %1233 = vmatprep.subr.bf16.mxu0 0
  %1234 = vmatpush2.bf16.msra.mxu0 0
  %1235 = vmatprep.subr.bf16.mxu0 0
  %1236 = vmatpush2.bf16.msra.mxu0 0
  %1237 = vmatprep.subr.bf16.mxu0 0
  %1238 = vmatpush2.bf16.msra.mxu0 0
  %1239 = vmatprep.subr.bf16.mxu0 0
  %1240 = vmatpush2.bf16.msra.mxu0 0
  %1241 = vmatprep.subr.bf16.mxu0 0
  %1242 = vmatpush2.bf16.msra.mxu0 0
  %1243 = vmatprep.mubr.bf16.mxu0 0
  %1244 = vmatmul.mubr.bf16.gmra.mxu0 %v37
  %v1245 = vpop.f32.mrf.mxu0
  %v1246 = vadd.f32 0.0, %v1245
  %v1247 = vpop.f32.mrf.mxu0
  %v1248 = vpop.f32.mrf.mxu0
  %v1249 = vadd.f32 0.0, %v1248
  %v1250 = vpop.f32.mrf.mxu0
  %1251 = vdwg.mxu0
  %v1252 = vmul.f32 %v1246, 10.0
  %v1253 = vmul.f32 %v1249, 10.0
  %v1254 = vmax.f32 %v1170, %v1252
  %v1255 = vmax.f32 %v1171, %v1253
  %v1256 = vsub.f32 %v1170, %v1254
  %v1257 = vsub.f32 %v1171, %v1255
  %v1258 = vmul.f32 %v1256, 1.442695
  %v1259 = vpow.pop %v1258
  %v1260 = vmul.f32 %v1257, 1.442695
  %v1261 = vpow.pop %v1260
  %v1262 = vsub.f32 %v1252, %v1254
  %v1263 = vsub.f32 %v1253, %v1255
  %v1264 = vmul.f32 %v1262, 1.442695
  %v1265 = vpow.pop %v1264
  %v1266 = vmul.f32 %v1263, 1.442695
  %v1267 = vpow.pop %v1266
  %v1268 = vmul.f32 %v1259, %v1186
  %v1269 = vmul.f32 %v1261, %v1187
  %v1270 = vadd.f32 %v1268, %v1265
  %v1271 = vadd.f32 %v1269, %v1267
  %v1272 = vmul.f32 %v1259, %v1192
  %v1273 = vmul.f32 %v1261, %v1193
  %v1274 = vmul.f32 %v1246, %v1265
  %v1275 = vmul.f32 %v1249, %v1267
  %v1276 = vadd.f32 %v1272, %v1274
  %v1277 = vadd.f32 %v1273, %v1275
  %s1278 = scalar_lea.vmem %s1, 240
  %v1279 = vld [vmem:[%s1278] sm:$0xf]
  %v1280 = vld [vmem:[%s1278 + $0x4] sm:$0xf]
  %v1281 = vld [vmem:[%s1278 + $0x8] sm:$0xf]
  %v1282 = vld [vmem:[%s1278 + $0xc] sm:$0xf]
  %v1287 = vunpack.c.l.b16 %v1279
  %v1288 = vunpack.c.l.b16 %v1280
  %v1289 = vunpack.c.l.b16 %v1281
  %v1290 = vunpack.c.l.b16 %v1282
  %v1291 = vpack.c.b16 %v1288, %v1287
  %v1292 = vpack.c.b16 %v1290, %v1289
  %1295 = vmatprep.subr.bf16.mxu0 0
  %1296 = vmatpush1.bf16.msra.mxu0 0
  %1297 = vmatprep.subr.bf16.mxu0 0
  %1298 = vmatpush1.bf16.msra.mxu0 0
  %1299 = vmatprep.subr.bf16.mxu0 0
  %1300 = vmatpush1.bf16.msra.mxu0 0
  %1301 = vmatprep.subr.bf16.mxu0 0
  %1302 = vmatpush1.bf16.msra.mxu0 0
  %1303 = vmatprep.subr.bf16.mxu0 0
  %1304 = vmatpush1.bf16.msra.mxu0 0
  %1305 = vmatprep.subr.bf16.mxu0 0
  %1306 = vmatpush1.bf16.msra.mxu0 0
  %1307 = vmatprep.subr.bf16.mxu0 0
  %1308 = vmatpush1.bf16.msra.mxu0 %v1292
  %1309 = vmatprep.subr.bf16.mxu0 0
  %1310 = vmatpush1.bf16.msra.mxu0 %v1291
  %1311 = vmatprep.subr.bf16.mxu0 0
  %1312 = vmatpush2.bf16.msra.mxu0 0
  %1313 = vmatprep.subr.bf16.mxu0 0
  %1314 = vmatpush2.bf16.msra.mxu0 0
  %1315 = vmatprep.subr.bf16.mxu0 0
  %1316 = vmatpush2.bf16.msra.mxu0 0
  %1317 = vmatprep.subr.bf16.mxu0 0
  %1318 = vmatpush2.bf16.msra.mxu0 0
  %1319 = vmatprep.subr.bf16.mxu0 0
  %1320 = vmatpush2.bf16.msra.mxu0 0
  %1321 = vmatprep.subr.bf16.mxu0 0
  %1322 = vmatpush2.bf16.msra.mxu0 0
  %1323 = vmatprep.subr.bf16.mxu0 0
  %1324 = vmatpush2.bf16.msra.mxu0 0
  %1325 = vmatprep.subr.bf16.mxu0 0
  %1326 = vmatpush2.bf16.msra.mxu0 0
  %1327 = vmatprep.mubr.bf16.mxu0 0
  %1328 = vmatmul.mubr.bf16.gmra.mxu0 %v37
  %v1329 = vpop.f32.mrf.mxu0
  %v1330 = vadd.f32 0.0, %v1329
  %v1331 = vpop.f32.mrf.mxu0
  %v1332 = vpop.f32.mrf.mxu0
  %v1333 = vadd.f32 0.0, %v1332
  %v1334 = vpop.f32.mrf.mxu0
  %1335 = vdwg.mxu0
  %v1336 = vmul.f32 %v1330, 10.0
  %v1337 = vmul.f32 %v1333, 10.0
  %v1338 = vmax.f32 %v1254, %v1336
  %v1339 = vmax.f32 %v1255, %v1337
  %v1340 = vsub.f32 %v1254, %v1338
  %v1341 = vsub.f32 %v1255, %v1339
  %v1342 = vmul.f32 %v1340, 1.442695
  %v1343 = vpow.pop %v1342
  %v1344 = vmul.f32 %v1341, 1.442695
  %v1345 = vpow.pop %v1344
  %v1346 = vsub.f32 %v1336, %v1338
  %v1347 = vsub.f32 %v1337, %v1339
  %v1348 = vmul.f32 %v1346, 1.442695
  %v1349 = vpow.pop %v1348
  %v1350 = vmul.f32 %v1347, 1.442695
  %v1351 = vpow.pop %v1350
  %v1352 = vmul.f32 %v1343, %v1270
  %v1353 = vmul.f32 %v1345, %v1271
  %v1354 = vadd.f32 %v1352, %v1349
  %v1355 = vadd.f32 %v1353, %v1351
  %v1356 = vmul.f32 %v1343, %v1276
  %v1357 = vmul.f32 %v1345, %v1277
  %v1358 = vmul.f32 %v1330, %v1349
  %v1359 = vmul.f32 %v1333, %v1351
  %v1360 = vadd.f32 %v1356, %v1358
  %v1361 = vadd.f32 %v1357, %v1359
  %v1362 = vrcp.pop %v1354
  %v1363 = vmul.f32 %v1360, %v1362
  %v1364 = vrcp.pop %v1355
  %v1365 = vmul.f32 %v1361, %v1364
  %v1366 = vlaneseq
  %v1367 = vshrl.u32 %v1366, 7
  %v1368 = vlaneseq
  %v1369 = vand.u32 %v1368, 127
  %vm1370 = vcmp.eq.s32.totalorder %v1367, %v1369
  %v1371 = vsel %vm1370, %v1363, 0.0
  %vm1372 = vcmask 9216
  %v1373 = vsel %vm1372, %v1371, 0.0
  %v1374 = vrot.slane %v1373, 4
  %v1375 = vadd.f32 %v1373, %v1374
  %v1376 = vrot.slane %v1375, 2
  %v1377 = vadd.f32 %v1375, %v1376
  %v1378 = vrot.slane %v1377, 1
  %v1379 = vadd.f32 %v1377, %v1378
  %1380 = vadd.xlane.f32.xlu0 %v1373
  %v1381 = vpop.xlane.xlu0 %1380
  %v1382 = vadd.f32 %v1363, 0.2
  %v1383 = vsub.f32 %v1382, %v1379
  %v1384 = vmax.f32 %v1383, 0.0
  %v1385 = vsel %vm1370, 0.0, %v1384
  %v1386 = vsub.f32 %v1382, %v1381
  %v1387 = vmax.f32 %v1386, 0.0
  %v1388 = vsel %vm1370, 0.0, %v1387
  %v1389 = vsel %vm1372, %v1385, -inf
  %v1390 = vrot.slane %v1389, 4
  %v1391 = vmax.f32 %v1389, %v1390
  %v1392 = vrot.slane %v1391, 2
  %v1393 = vmax.f32 %v1391, %v1392
  %v1394 = vrot.slane %v1393, 1
  %v1395 = vmax.f32 %v1393, %v1394
  %v1396 = vsel %vm1372, %v1388, -inf
  %1397 = vmax.xlane.f32.xlu0 %v1396
  %v1398 = vpop.xlane.xlu0 %1397
  %v1400 = vlaneseq
  %v1401 = vshrl.u32 %v1400, 7
  %v1402 = vsub.s32 %v1369, %v1401
  %v1403 = vrot.slane %v1398, %v1402
  %v1405 = vadd.f32 %v1395, %v1403
  %vm1406 = vcmask 8192
  %1407 = vst.msk [vmem:[%s2] sm:$0x1] %vm1406, %v1405
  %v1409 = vrot.slane %v1363, 2
  %v1411 = vsel %vm1370, %v1409, 0.0
  %v1412 = vsel %vm1372, %v1411, 0.0
  %v1413 = vrot.slane %v1412, 4
  %v1414 = vadd.f32 %v1412, %v1413
  %v1415 = vrot.slane %v1414, 2
  %v1416 = vadd.f32 %v1414, %v1415
  %v1417 = vrot.slane %v1416, 1
  %v1418 = vadd.f32 %v1416, %v1417
  %1419 = vadd.xlane.f32.xlu0 %v1412
  %v1420 = vpop.xlane.xlu0 %1419
  %v1421 = vsub.f32 %v1382, %v1418
  %v1422 = vmax.f32 %v1421, 0.0
  %v1424 = vrot.slane %v1422, 2
  %v1426 = vsel %vm1370, 0.0, %v1424
  %v1428 = vrot.slane %v1420, 6
  %v1430 = vsub.f32 %v1382, %v1428
  %v1431 = vmax.f32 %v1430, 0.0
  %v1433 = vrot.slane %v1431, 2
  %v1435 = vsel %vm1370, 0.0, %v1433
  %v1436 = vsel %vm1372, %v1426, -inf
  %v1437 = vrot.slane %v1436, 4
  %v1438 = vmax.f32 %v1436, %v1437
  %v1439 = vrot.slane %v1438, 2
  %v1440 = vmax.f32 %v1438, %v1439
  %v1441 = vrot.slane %v1440, 1
  %v1442 = vmax.f32 %v1440, %v1441
  %v1443 = vsel %vm1372, %v1435, -inf
  %1444 = vmax.xlane.f32.xlu0 %v1443
  %v1445 = vpop.xlane.xlu0 %1444
  %v1447 = vlaneseq
  %v1448 = vshrl.u32 %v1447, 7
  %v1449 = vsub.s32 %v1369, %v1448
  %v1450 = vrot.slane %v1445, %v1449
  %v1452 = vadd.f32 %v1442, %v1450
  %1453 = vst.msk [vmem:[%s2 + $0x1] sm:$0x1] %vm1406, %v1452
  %v1454 = vrot.slane %v1363, 4
  %v1456 = vsel %vm1370, %v1454, 0.0
  %v1457 = vsel %vm1372, %v1456, 0.0
  %v1458 = vrot.slane %v1457, 4
  %v1459 = vadd.f32 %v1457, %v1458
  %v1460 = vrot.slane %v1459, 2
  %v1461 = vadd.f32 %v1459, %v1460
  %v1462 = vrot.slane %v1461, 1
  %v1463 = vadd.f32 %v1461, %v1462
  %1464 = vadd.xlane.f32.xlu0 %v1457
  %v1465 = vpop.xlane.xlu0 %1464
  %v1466 = vsub.f32 %v1382, %v1463
  %v1467 = vmax.f32 %v1466, 0.0
  %v1469 = vrot.slane %v1467, 4
  %v1471 = vsel %vm1370, 0.0, %v1469
  %v1473 = vrot.slane %v1465, 4
  %v1475 = vsub.f32 %v1382, %v1473
  %v1476 = vmax.f32 %v1475, 0.0
  %v1478 = vrot.slane %v1476, 4
  %v1480 = vsel %vm1370, 0.0, %v1478
  %v1481 = vsel %vm1372, %v1471, -inf
  %v1482 = vrot.slane %v1481, 4
  %v1483 = vmax.f32 %v1481, %v1482
  %v1484 = vrot.slane %v1483, 2
  %v1485 = vmax.f32 %v1483, %v1484
  %v1486 = vrot.slane %v1485, 1
  %v1487 = vmax.f32 %v1485, %v1486
  %v1488 = vsel %vm1372, %v1480, -inf
  %1489 = vmax.xlane.f32.xlu0 %v1488
  %v1490 = vpop.xlane.xlu0 %1489
  %v1492 = vlaneseq
  %v1493 = vshrl.u32 %v1492, 7
  %v1494 = vsub.s32 %v1369, %v1493
  %v1495 = vrot.slane %v1490, %v1494
  %v1497 = vadd.f32 %v1487, %v1495
  %1498 = vst.msk [vmem:[%s2 + $0x2] sm:$0x1] %vm1406, %v1497
  %v1499 = vrot.slane %v1363, 6
  %v1501 = vsel %vm1370, %v1499, 0.0
  %v1502 = vsel %vm1372, %v1501, 0.0
  %v1503 = vrot.slane %v1502, 4
  %v1504 = vadd.f32 %v1502, %v1503
  %v1505 = vrot.slane %v1504, 2
  %v1506 = vadd.f32 %v1504, %v1505
  %v1507 = vrot.slane %v1506, 1
  %v1508 = vadd.f32 %v1506, %v1507
  %1509 = vadd.xlane.f32.xlu0 %v1502
  %v1510 = vpop.xlane.xlu0 %1509
  %v1511 = vsub.f32 %v1382, %v1508
  %v1512 = vmax.f32 %v1511, 0.0
  %v1514 = vrot.slane %v1512, 6
  %v1516 = vsel %vm1370, 0.0, %v1514
  %v1518 = vrot.slane %v1510, 2
  %v1520 = vsub.f32 %v1382, %v1518
  %v1521 = vmax.f32 %v1520, 0.0
  %v1523 = vrot.slane %v1521, 6
  %v1525 = vsel %vm1370, 0.0, %v1523
  %v1526 = vsel %vm1372, %v1516, -inf
  %v1527 = vrot.slane %v1526, 4
  %v1528 = vmax.f32 %v1526, %v1527
  %v1529 = vrot.slane %v1528, 2
  %v1530 = vmax.f32 %v1528, %v1529
  %v1531 = vrot.slane %v1530, 1
  %v1532 = vmax.f32 %v1530, %v1531
  %v1533 = vsel %vm1372, %v1525, -inf
  %1534 = vmax.xlane.f32.xlu0 %v1533
  %v1535 = vpop.xlane.xlu0 %1534
  %v1537 = vlaneseq
  %v1538 = vshrl.u32 %v1537, 7
  %v1539 = vsub.s32 %v1369, %v1538
  %v1540 = vrot.slane %v1535, %v1539
  %v1542 = vadd.f32 %v1532, %v1540
  %1543 = vst.msk [vmem:[%s2 + $0x3] sm:$0x1] %vm1406, %v1542
  %v1544 = vsel %vm1370, %v1365, 0.0
  %v1545 = vsel %vm1372, %v1544, 0.0
  %v1546 = vrot.slane %v1545, 4
  %v1547 = vadd.f32 %v1545, %v1546
  %v1548 = vrot.slane %v1547, 2
  %v1549 = vadd.f32 %v1547, %v1548
  %v1550 = vrot.slane %v1549, 1
  %v1551 = vadd.f32 %v1549, %v1550
  %1552 = vadd.xlane.f32.xlu0 %v1545
  %v1553 = vpop.xlane.xlu0 %1552
  %v1554 = vadd.f32 %v1365, 0.2
  %v1555 = vsub.f32 %v1554, %v1551
  %v1556 = vmax.f32 %v1555, 0.0
  %v1557 = vsel %vm1370, 0.0, %v1556
  %v1558 = vsub.f32 %v1554, %v1553
  %v1559 = vmax.f32 %v1558, 0.0
  %v1560 = vsel %vm1370, 0.0, %v1559
  %v1561 = vsel %vm1372, %v1557, -inf
  %v1562 = vrot.slane %v1561, 4
  %v1563 = vmax.f32 %v1561, %v1562
  %v1564 = vrot.slane %v1563, 2
  %v1565 = vmax.f32 %v1563, %v1564
  %v1566 = vrot.slane %v1565, 1
  %v1567 = vmax.f32 %v1565, %v1566
  %v1568 = vsel %vm1372, %v1560, -inf
  %1569 = vmax.xlane.f32.xlu0 %v1568
  %v1570 = vpop.xlane.xlu0 %1569
  %v1572 = vlaneseq
  %v1573 = vshrl.u32 %v1572, 7
  %v1574 = vsub.s32 %v1369, %v1573
  %v1575 = vrot.slane %v1570, %v1574
  %v1577 = vadd.f32 %v1567, %v1575
  %1578 = vst.msk [vmem:[%s2 + $0x4] sm:$0x1] %vm1406, %v1577
  %v1580 = vrot.slane %v1365, 2
  %v1582 = vsel %vm1370, %v1580, 0.0
  %v1583 = vsel %vm1372, %v1582, 0.0
  %v1584 = vrot.slane %v1583, 4
  %v1585 = vadd.f32 %v1583, %v1584
  %v1586 = vrot.slane %v1585, 2
  %v1587 = vadd.f32 %v1585, %v1586
  %v1588 = vrot.slane %v1587, 1
  %v1589 = vadd.f32 %v1587, %v1588
  %1590 = vadd.xlane.f32.xlu0 %v1583
  %v1591 = vpop.xlane.xlu0 %1590
  %v1592 = vsub.f32 %v1554, %v1589
  %v1593 = vmax.f32 %v1592, 0.0
  %v1595 = vrot.slane %v1593, 2
  %v1597 = vsel %vm1370, 0.0, %v1595
  %v1599 = vrot.slane %v1591, 6
  %v1601 = vsub.f32 %v1554, %v1599
  %v1602 = vmax.f32 %v1601, 0.0
  %v1604 = vrot.slane %v1602, 2
  %v1606 = vsel %vm1370, 0.0, %v1604
  %v1607 = vsel %vm1372, %v1597, -inf
  %v1608 = vrot.slane %v1607, 4
  %v1609 = vmax.f32 %v1607, %v1608
  %v1610 = vrot.slane %v1609, 2
  %v1611 = vmax.f32 %v1609, %v1610
  %v1612 = vrot.slane %v1611, 1
  %v1613 = vmax.f32 %v1611, %v1612
  %v1614 = vsel %vm1372, %v1606, -inf
  %1615 = vmax.xlane.f32.xlu0 %v1614
  %v1616 = vpop.xlane.xlu0 %1615
  %v1618 = vlaneseq
  %v1619 = vshrl.u32 %v1618, 7
  %v1620 = vsub.s32 %v1369, %v1619
  %v1621 = vrot.slane %v1616, %v1620
  %v1623 = vadd.f32 %v1613, %v1621
  %1624 = vst.msk [vmem:[%s2 + $0x5] sm:$0x1] %vm1406, %v1623
  %v1625 = vrot.slane %v1365, 4
  %v1627 = vsel %vm1370, %v1625, 0.0
  %v1628 = vsel %vm1372, %v1627, 0.0
  %v1629 = vrot.slane %v1628, 4
  %v1630 = vadd.f32 %v1628, %v1629
  %v1631 = vrot.slane %v1630, 2
  %v1632 = vadd.f32 %v1630, %v1631
  %v1633 = vrot.slane %v1632, 1
  %v1634 = vadd.f32 %v1632, %v1633
  %1635 = vadd.xlane.f32.xlu0 %v1628
  %v1636 = vpop.xlane.xlu0 %1635
  %v1637 = vsub.f32 %v1554, %v1634
  %v1638 = vmax.f32 %v1637, 0.0
  %v1640 = vrot.slane %v1638, 4
  %v1642 = vsel %vm1370, 0.0, %v1640
  %v1644 = vrot.slane %v1636, 4
  %v1646 = vsub.f32 %v1554, %v1644
  %v1647 = vmax.f32 %v1646, 0.0
  %v1649 = vrot.slane %v1647, 4
  %v1651 = vsel %vm1370, 0.0, %v1649
  %v1652 = vsel %vm1372, %v1642, -inf
  %v1653 = vrot.slane %v1652, 4
  %v1654 = vmax.f32 %v1652, %v1653
  %v1655 = vrot.slane %v1654, 2
  %v1656 = vmax.f32 %v1654, %v1655
  %v1657 = vrot.slane %v1656, 1
  %v1658 = vmax.f32 %v1656, %v1657
  %v1659 = vsel %vm1372, %v1651, -inf
  %1660 = vmax.xlane.f32.xlu0 %v1659
  %v1661 = vpop.xlane.xlu0 %1660
  %v1663 = vlaneseq
  %v1664 = vshrl.u32 %v1663, 7
  %v1665 = vsub.s32 %v1369, %v1664
  %v1666 = vrot.slane %v1661, %v1665
  %v1668 = vadd.f32 %v1658, %v1666
  %1669 = vst.msk [vmem:[%s2 + $0x6] sm:$0x1] %vm1406, %v1668
  %v1670 = vrot.slane %v1365, 6
  %v1672 = vsel %vm1370, %v1670, 0.0
  %v1673 = vsel %vm1372, %v1672, 0.0
  %v1674 = vrot.slane %v1673, 4
  %v1675 = vadd.f32 %v1673, %v1674
  %v1676 = vrot.slane %v1675, 2
  %v1677 = vadd.f32 %v1675, %v1676
  %v1678 = vrot.slane %v1677, 1
  %v1679 = vadd.f32 %v1677, %v1678
  %1680 = vadd.xlane.f32.xlu0 %v1673
  %v1681 = vpop.xlane.xlu0 %1680
  %v1682 = vsub.f32 %v1554, %v1679
  %v1683 = vmax.f32 %v1682, 0.0
  %v1685 = vrot.slane %v1683, 6
  %v1687 = vsel %vm1370, 0.0, %v1685
  %v1689 = vrot.slane %v1681, 2
  %v1691 = vsub.f32 %v1554, %v1689
  %v1692 = vmax.f32 %v1691, 0.0
  %v1694 = vrot.slane %v1692, 6
  %v1696 = vsel %vm1370, 0.0, %v1694
  %v1697 = vsel %vm1372, %v1687, -inf
  %v1698 = vrot.slane %v1697, 4
  %v1699 = vmax.f32 %v1697, %v1698
  %v1700 = vrot.slane %v1699, 2
  %v1701 = vmax.f32 %v1699, %v1700
  %v1702 = vrot.slane %v1701, 1
  %v1703 = vmax.f32 %v1701, %v1702
  %v1704 = vsel %vm1372, %v1696, -inf
  %1705 = vmax.xlane.f32.xlu0 %v1704
  %v1706 = vpop.xlane.xlu0 %1705
  %v1708 = vlaneseq
  %v1709 = vshrl.u32 %v1708, 7
  %v1710 = vsub.s32 %v1369, %v1709
  %v1711 = vrot.slane %v1706, %v1710
  %v1713 = vadd.f32 %v1703, %v1711
  %1714 = vst.msk [vmem:[%s2 + $0x7] sm:$0x1] %vm1406, %v1713
  // Predicated region
  $region10: #{grounding_forward_loss.1} parent=0 // pred_check
    _
  $region11: #{grounding_forward_loss.1} parent=0 // pred_check_branch
    %1716 = sbr.rel (0) target = $region13
  $region12: #{grounding_forward_loss.1} parent=0 // pred_region
    _
  $region13: #{grounding_forward_loss.1} parent=0 // pred_fallthru
    _
  // Predicated region
  $region14: #{grounding_forward_loss.1} parent=0 // pred_check
    _
  $region15: #{grounding_forward_loss.1} parent=0 // pred_check_branch
    %1718 = sbr.rel (0) target = $region17
  $region16: #{grounding_forward_loss.1} parent=0 // pred_region
    _
  $region17: #{grounding_forward_loss.1} parent=0 // pred_fallthru
    _

</llo_original>
